<compile_context>
chip_gen: v7x
topology: tpu7x:2x2x1
jax: 0.10.0
libtpu: 0.0.40
codegen_flags: <defaults>
</compile_context>

<pallas_src>
import functools
import math

import jax
import jax.numpy as jnp
from jax import lax
from jax.experimental import pallas as pl
from jax.experimental.pallas import tpu as pltpu

NEG_INF = -1e30
_LOG_EPS = math.log(1e-8)

_VMEM_CAP = None


def _vmem_cap_bytes():
    """Per-generation VMEM budget: ~80% of physical (headroom for Mosaic scratch)."""
    global _VMEM_CAP
    if _VMEM_CAP is None:
        try:
            cap = int(pltpu.get_tpu_info().vmem_capacity_bytes)
        except Exception:                       # conservative fallback
            cap = 128 << 20
        _VMEM_CAP = max(int(cap * 0.8), 16 << 20)
    return _VMEM_CAP


def _compiler_params(semantics, *byte_counts):
    """dimension_semantics + a VMEM limit sized from blocks, capped per chip."""
    est = 2 * sum(byte_counts) + (1 << 20)      # double-buffering + headroom
    vmem = int(min(max(est, 16 << 20), _vmem_cap_bytes()))
    return pltpu.CompilerParams(dimension_semantics=semantics,
                                vmem_limit_bytes=vmem)


def _row_tile(n, max_tile):
    """Largest power-of-two row tile (>=8) dividing n, else the full extent."""
    for t in (512, 256, 128, 64, 32, 16, 8):
        if t <= max_tile and t <= n and n % t == 0:
            return t
    return n


# ----------------------------------------------------------------------------
# Pallas kernels
# ----------------------------------------------------------------------------

def _scores_kernel(scale, x_ref, xt_ref, wq_ref, bq_ref, wkT_ref, bkT_ref, s_ref):
    x = x_ref[0]                       # [tq, C]  rows of this tile (for Q)
    xt = xt_ref[0]                     # [C, N]   all pixels, channel-major (for K^T)
    C = x.shape[-1]
    # Per-pixel linear projection as C (=3) VPU FMAs — a depth-C MXU matmul
    # would use ~C/256 of the systolic array and x would lane-pad 3 -> 128.
    q = x[:, 0:1] * wq_ref[0:1, :]               # [tq, Dp]
    kT = wkT_ref[:, 0:1] * xt[0:1, :]            # [Dp, N]
    for c in range(1, C):
        q = q + x[:, c:c + 1] * wq_ref[c:c + 1, :]
        kT = kT + wkT_ref[:, c:c + 1] * xt[c:c + 1, :]
    q = q + bq_ref[...]
    kT = kT + bkT_ref[...]
    # bf16 MXU operands, f32 accumulation; NN matmul (K already transposed,
    # no in-kernel transpose / XLU work).
    s = jnp.dot(q.astype(jnp.bfloat16), kT.astype(jnp.bfloat16),
                preferred_element_type=jnp.float32)
    s_ref[0] = s * scale


def pallas_affinity_scores(x_rows, x_chan, wq, bq, wkT, bkT, scale):
    """All-pairs affinity S[b] = (Q_b K_b^T) * scale with the per-pixel
    projection fused in-kernel (no ks/qs HBM round trip).  Q rows are tiled so
    the resident blocks fit v7x's 64 MiB VMEM and small-B grids still expose
    >= 2 parallel steps.
    TODO(synk): for large N, fuse the neighbour gather onto the S tile so the
    O(N^2) score matrix never round-trips HBM."""
    B, N, C = x_rows.shape
    Dp = wq.shape[1]
    tq = _row_tile(N, 256)
    blk = 4 * (tq * C + C * N + 2 * C * Dp + 2 * Dp + tq * N) + 6 * Dp * (N + tq)
    return pl.pallas_call(
        functools.partial(_scores_kernel, scale),
        out_shape=jax.ShapeDtypeStruct((B, N, N), jnp.float32),
        grid=(B, N // tq),
        in_specs=[pl.BlockSpec((1, tq, C), lambda b, i: (b, i, 0)),
                  pl.BlockSpec((1, C, N), lambda b, i: (b, 0, 0)),
                  pl.BlockSpec((C, Dp), lambda b, i: (0, 0)),
                  pl.BlockSpec((1, Dp), lambda b, i: (0, 0)),
                  pl.BlockSpec((Dp, C), lambda b, i: (0, 0)),
                  pl.BlockSpec((Dp, 1), lambda b, i: (0, 0))],
        out_specs=pl.BlockSpec((1, tq, N), lambda b, i: (b, i, 0)),
        compiler_params=_compiler_params(("parallel", "parallel"), blk),
    )(x_rows, x_chan, wq, bq, wkT, bkT)


def _adj_kl_kernel(Kt, l_ref, seg_ref, segv_ref, adj_ref, kl_ref, agg_ref):
    x = l_ref[0]                    # [tn, Ktp] padded logits (pad slots == NEG_INF)
    seg = seg_ref[0]                # [tn, 1]   segment label of the row pixel
    segv = segv_ref[0]              # [tn, Ktp] segment labels of the neighbours
    tn, Ktp = x.shape
    valid = (lax.broadcasted_iota(jnp.int32, (tn, Ktp), 1) < Kt).astype(jnp.float32)
    mask = (seg != 0).astype(jnp.float32) * valid        # loss mask (no gather needed)
    targets = (segv == seg).astype(jnp.float32) * valid  # binary KL targets
    maxes = jnp.max(x, axis=-1, keepdims=True)
    x_exp = jnp.exp(x - maxes)                           # pad slots -> exactly 0
    # softmax(x)/max(softmax(x)) == exp(x - rowmax) (row max of softmax is 1/sum).
    adj_ref[0] = x_exp
    # weighted_softmax + masked KL in log space: one [tn,1] log, no full-tile
    # log or divide.
    denom = jnp.sum(x_exp * mask, axis=-1, keepdims=True) + 1e-12
    y_pred = jnp.maximum((x - maxes) - jnp.log(denom), _LOG_EPS)
    cnt = jnp.sum(targets, axis=-1, keepdims=True)
    inv_cnt = 1.0 / (cnt + 1e-9)                         # y_true where target == 1
    log_y_true = -jnp.log(cnt + 1e-9)
    kl = targets * (inv_cnt * (log_y_true - y_pred)) * mask
    kl_ref[0] = jnp.sum(kl, axis=-1, keepdims=True)
    agg_ref[0] = (seg != 0).astype(jnp.float32)


def pallas_adjacency_and_kl(logits, seg, seg_v, Kt):
    """Single pass over the padded logits producing the propagation adjacency
    and the weighted-softmax KL loss terms; the loss mask/targets are built
    in-kernel from the (tiny) segment labels."""
    B, N, Ktp = logits.shape
    tn = _row_tile(N, 512)
    blk = 4 * (3 * tn * Ktp + 3 * tn)
    spec_nk = pl.BlockSpec((1, tn, Ktp), lambda b, i: (b, i, 0))
    spec_n1 = pl.BlockSpec((1, tn, 1), lambda b, i: (b, i, 0))
    return pl.pallas_call(
        functools.partial(_adj_kl_kernel, Kt),
        out_shape=(jax.ShapeDtypeStruct((B, N, Ktp), jnp.float32),
                   jax.ShapeDtypeStruct((B, N, 1), jnp.float32),
                   jax.ShapeDtypeStruct((B, N, 1), jnp.float32)),
        grid=(B, N // tn),
        in_specs=[spec_nk, spec_n1, spec_nk],
        out_specs=(spec_nk, spec_n1, spec_n1),
        compiler_params=_compiler_params(("parallel", "parallel"), blk),
    )(logits, seg, seg_v)


def _prop_comp_kernel(num_iters, at_ref, h0t_ref, wt_ref, b_ref,
                      prop_ref, m_ref, a_ref, ht_scr):
    bb = at_ref.shape[0]
    ht_scr[...] = h0t_ref[...]                            # [bb, D, N] f32 master copy

    def step(b, exact):
        # bf16 MXU operands (A^T arrives bf16, hT cast at matmul time), f32 acc.
        h = jnp.dot(ht_scr[b].astype(jnp.bfloat16), at_ref[b],
                    preferred_element_type=jnp.float32)   # [D, N]
        denom = jnp.sum(h, axis=0, keepdims=True) + 1e-8  # [1, N]
        if exact:
            return h / denom                              # exact final normalise
        return h * pl.reciprocal(denom, approx=True)

    def body(_, carry):
        # Static loop over the batch block: independent matmuls interleave so
        # one batch's normalise (XLU reduce + EUP recip) hides behind the
        # other's MXU push in this latency-bound 272-step chain.
        for b in range(bb):
            ht_scr[b] = step(b, exact=False)
        return carry

    lax.fori_loop(0, num_iters - 1, body, 0, unroll=2)

    for b in range(bb):
        hb = step(b, exact=True)
        prop_ref[b] = hb
        # competition: mask-slot projection + winner-take-all (lowest-index ties)
        s = jnp.dot(wt_ref[...], hb, preferred_element_type=jnp.float32) + b_ref[...]
        M, N = s.shape
        mx = jnp.max(s, axis=0, keepdims=True)
        m_iota = lax.broadcasted_iota(jnp.int32, (M, N), 0).astype(jnp.float32)
        winner = jnp.min(jnp.where(s >= mx, m_iota, float(M)), axis=0, keepdims=True)
        masks = (m_iota == winner).astype(jnp.float32)
        m_ref[b] = masks
        a_ref[b] = (jnp.sum(masks, axis=-1, keepdims=True) > 0).astype(jnp.float32)


def pallas_propagation_competition(adj_t_bf16, h0_t, comp_wT, comp_b, num_iters):
    """num_iters steps of h <- normalize(A @ h) computed transposed
    (h^T <- h^T @ A^T, lane-dense in N), with the competition head fused onto
    the epilogue so the propagation map is not re-read from HBM.
    A^T is single-use-per-batch and reused 272x in-kernel, so it is fed bf16
    (half the VMEM/HBM footprint of f32 double-buffering)."""
    B, N, _ = adj_t_bf16.shape
    D = h0_t.shape[1]
    M = comp_wT.shape[0]
    bb = 2 if B % 2 == 0 else 1
    blk = 2 * bb * N * N + 4 * (3 * bb * D * N + M * D + M + bb * M * N + bb * M)
    return pl.pallas_call(
        functools.partial(_prop_comp_kernel, num_iters),
        out_shape=(jax.ShapeDtypeStruct((B, D, N), jnp.float32),
                   jax.ShapeDtypeStruct((B, M, N), jnp.float32),
                   jax.ShapeDtypeStruct((B, M, 1), jnp.float32)),
        grid=(B // bb,),
        in_specs=[pl.BlockSpec((bb, N, N), lambda g: (g, 0, 0)),
                  pl.BlockSpec((bb, D, N), lambda g: (g, 0, 0)),
                  pl.BlockSpec((M, D), lambda g: (0, 0)),
                  pl.BlockSpec((M, 1), lambda g: (0, 0))],
        out_specs=(pl.BlockSpec((bb, D, N), lambda g: (g, 0, 0)),
                   pl.BlockSpec((bb, M, N), lambda g: (g, 0, 0)),
                   pl.BlockSpec((bb, M, 1), lambda g: (g, 0, 0))),
        scratch_shapes=[pltpu.VMEM((bb, D, N), jnp.float32)],
        compiler_params=_compiler_params(("parallel",), blk),
    )(adj_t_bf16, h0_t, comp_wT, comp_b)


# ----------------------------------------------------------------------------
# Glue (index construction, gathers, parameter setup) in plain JAX
# ----------------------------------------------------------------------------

def generate_local_indices(img_size, K):
    """Faithful port: reflection-pad an index map and unfold KxK patches."""
    H, W = img_size
    half_K = (K - 1) // 2
    idx = jnp.arange(H * W, dtype=jnp.float32).reshape(H, W)
    padded = jnp.pad(idx, half_K, mode="reflect")
    cols = []
    for kh in range(K):
        for kw in range(K):
            cols.append(padded[kh:kh + H, kw:kw + W].reshape(-1))
    return jnp.stack(cols, axis=-1).astype(jnp.int32)    # [H*W, K*K]


def nearest_resize(x, size):
    """F.interpolate(..., mode='nearest') on NCHW."""
    B, C, h, w = x.shape
    Ht, Wt = size
    ri = (jnp.arange(Ht) * h) // Ht
    ci = (jnp.arange(Wt) * w) // Wt
    return x[:, :, ri[:, None], ci[None, :]]


class MetaNetPallas:
    def __init__(self, key, channel_dim=3, resolution=(8, 8), max_num_masks=8,
                 backbone_feature_dim=32):
        self.W, self.H = resolution
        self.K = 7
        self.supervision_level = 1
        self.num_prop_itrs = 272
        self.num_masks = max_num_masks
        self.prop_dim = 32
        self.kq_dim = 132
        self.kq_pad = 256                                 # lane-dense padding
        self.latent_dim = backbone_feature_dim
        self.num_long_range = int(self.K ** 2 * 0.7)      # 34
        self.Kt = self.K * self.K + self.num_long_range   # 83
        self.Kt_pad = 128                                 # lane-dense padding
        self.local_indices = generate_local_indices([self.W, self.H], self.K)

        ks = jax.random.split(key, 6)
        s = 0.05
        # TODO(synk): ResidualDenseNetwork backbone is an external module; replaced
        # by a deterministic per-pixel linear projection (folded into ks/qs below).
        backbone_w = s * jax.random.normal(ks[0], (channel_dim, self.latent_dim), jnp.float32)
        backbone_b = jnp.zeros((self.latent_dim,), jnp.float32)
        ks_w = s * jax.random.normal(ks[1], (self.latent_dim, self.kq_dim), jnp.float32)
        ks_b = s * jax.random.normal(ks[2], (self.kq_dim,), jnp.float32)
        qs_w = s * jax.random.normal(ks[3], (self.latent_dim, self.kq_dim), jnp.float32)
        qs_b = s * jax.random.normal(ks[4], (self.kq_dim,), jnp.float32)

        def fold(w, b):
            wp = jnp.zeros((self.latent_dim, self.kq_pad), jnp.float32).at[:, :self.kq_dim].set(w)
            bp = jnp.zeros((self.kq_pad,), jnp.float32).at[:self.kq_dim].set(b)
            return backbone_w @ wp, backbone_b @ wp + bp      # [C, Dp], [Dp]

        wk, bk = fold(ks_w, ks_b)
        wq, bq = fold(qs_w, qs_b)
        self.wq = wq                                   # [C, Dp]  query projection
        self.bq = bq.reshape(1, self.kq_pad)           # [1, Dp]
        self.wkT = wk.T                                # [Dp, C]  key projection (pre-transposed)
        self.bkT = bk.reshape(self.kq_pad, 1)          # [Dp, 1]
        # TODO(synk): Competition module is external; replaced by linear projection
        # to mask slots + winner-take-all (Pallas, lowest-index tie-break).
        self.comp_wT = (s * jax.random.normal(ks[5], (self.prop_dim, self.num_masks),
                                              jnp.float32)).T          # [M, D]
        self.comp_b = jnp.zeros((self.num_masks, 1), jnp.float32)

    # ---- indices -------------------------------------------------------------
    def get_indices(self, resolution, B, key):
        W, H = resolution
        N = W * H
        v_local = jnp.broadcast_to(self.local_indices[None], (B, N, self.K * self.K))
        v_rand = jax.random.randint(key, (B, N, self.num_long_range), 0, N, dtype=jnp.int32)
        v = jnp.concatenate([v_local, v_rand], axis=-1)                # [B, N, Kt]
        # pad the neighbour axis to 128 (padded slots are masked everywhere)
        return jnp.pad(v, ((0, 0), (0, 0), (0, self.Kt_pad - self.Kt)))

    # ---- affinity (stand-in for the external affinity_calculator) -------------
    def calculate_affinity_logits(self, v_pad, ims):
        # TODO(synk): affinity_calculator is passed externally in the original
        # forward; here logits[b,u,k] = <qs_map(f_u), ks_map(f_v)> / sqrt(kq_dim).
        B, C, W, H = ims.shape
        N = W * H
        x_chan = ims.reshape(B, C, N)                  # channel-major (natural NCHW)
        x_rows = jnp.transpose(x_chan, (0, 2, 1))      # [B, N, C]
        scale = 1.0 / math.sqrt(self.kq_dim)
        S = pallas_affinity_scores(x_rows, x_chan, self.wq, self.bq,
                                   self.wkT, self.bkT, scale)          # [B, N, N]
        # TODO(synk): for large N fuse this data-dependent neighbour gather into
        # the scores kernel so S never round-trips HBM.
        logits = jnp.take_along_axis(S, v_pad, axis=-1)                # [B, N, Ktp]
        k_iota = jnp.arange(self.Kt_pad)[None, None, :]
        return jnp.where(k_iota < self.Kt, logits, NEG_INF)

    # ---- segment labels for the loss ------------------------------------------
    def _segments(self, v_pad, target_masks, size):
        B, N, Ktp = v_pad.shape
        if target_masks is None:
            return (jnp.zeros((B, N), jnp.int32),
                    jnp.zeros((B, N, Ktp), jnp.int32))
        if target_masks.ndim == 3:
            target_masks = target_masks[:, None]
        W, H = size
        tm = nearest_resize(target_masks.astype(jnp.float32), (W, H))
        seg = tm.reshape(B, N).astype(jnp.int32)
        seg_v = jnp.take_along_axis(
            jnp.broadcast_to(seg[:, :, None], (B, N, Ktp)), v_pad, axis=1)
        return seg, seg_v

    # ---- masks ---------------------------------------------------------------
    def compute_masks(self, adj_pad, v_pad, key):
        W, H = self.W, self.H
        B, N, _ = adj_pad.shape
        D = self.prop_dim
        h0 = jax.nn.softmax(jax.random.normal(key, (B, N, D), jnp.float32), axis=-1)
        h0T = jnp.transpose(h0, (0, 2, 1))                             # [B, D, N]
        # sparse_transpose=True affinity densified as A^T: A^T[b,u,v] += adj[b,u,k]
        # (padded adjacency entries are exactly 0, so they add nothing).
        # TODO(synk): for large N keep the graph sparse (Kt<=128 neighbours/node)
        # instead of this dense O(N^2) scatter + matmul.
        b_idx = jnp.broadcast_to(jnp.arange(B)[:, None, None], v_pad.shape)
        u_idx = jnp.broadcast_to(jnp.arange(N)[None, :, None], v_pad.shape)
        AT = jnp.zeros((B, N, N), jnp.float32).at[b_idx, u_idx, v_pad].add(adj_pad)
        # TODO(synk): GraphPropagation module is external; replaced by a normalized
        # power iteration h <- normalize(A @ h) for num_prop_itrs steps; only the
        # final propagation map is returned as `prop_maps`.
        propT, masksT, aliveT = pallas_propagation_competition(
            AT.astype(jnp.bfloat16), h0T, self.comp_wT, self.comp_b, self.num_prop_itrs)
        prop_map = jnp.transpose(propT, (0, 2, 1))                     # [B, N, D]
        masks = jnp.transpose(masksT, (0, 2, 1)).reshape(B, W, H, self.num_masks)
        alive = aliveT[:, :, 0]                                        # [B, M]
        return masks, alive, prop_map

    # ---- forward ---------------------------------------------------------------
    def forward(self, ims, key, target_masks=None):
        if ims.ndim == 3:
            ims = ims[None]
        # TODO(synk): transforms.Resize skipped; inputs assumed already at (W, H).
        B, C, W, H = ims.shape
        assert (W, H) == (self.W, self.H)
        key_idx, key_h = jax.random.split(key)

        all_logits = []
        loss = 0.0
        adj0, v0 = None, None
        for stride in range(1, self.supervision_level + 1):
            v_pad = self.get_indices((W, H), B, key_idx)
            logits_pad = self.calculate_affinity_logits(v_pad, ims)
            seg, seg_v = self._segments(v_pad, target_masks, (W, H))
            adj_pad, kl_rows, agg_rows = pallas_adjacency_and_kl(
                logits_pad, seg[:, :, None], seg_v, self.Kt)
            if target_masks is not None:
                loss = loss + jnp.sum(kl_rows) / (jnp.sum(agg_rows) + 1e-9)
            all_logits.append(logits_pad[..., :self.Kt])               # unpadded [B,N,83]
            if stride == 1:
                adj0, v0 = adj_pad, v_pad

        masks, alive, prop_maps = self.compute_masks(adj0, v0, key_h)
        return {"loss": loss, "masks": masks, "alive": alive,
                "all_logits": all_logits, "prop_maps": prop_maps}


# ----------------------------------------------------------------------------
# Demo
# ----------------------------------------------------------------------------
if __name__ == "__main__":
    key = jax.random.PRNGKey(0)
    k_img, k_tgt, k_params, k_fwd = jax.random.split(key, 4)

    B, C, W, H = 2, 3, 8, 8
    ims = jax.random.normal(k_img, (B, C, W, H), jnp.float32)        # NCHW
    target_masks = jax.random.randint(k_tgt, (B, W, H), 0, 4)        # integer labels

    net = MetaNetPallas(k_params, channel_dim=C, resolution=(W, H),
                        max_num_masks=8, backbone_feature_dim=32)

    outputs = net.forward(ims, k_fwd, target_masks=target_masks)
    outputs = jax.block_until_ready(outputs)

    assert outputs["masks"].shape == (B, W, H, 8)
    assert outputs["alive"].shape == (B, 8)
    assert outputs["all_logits"][0].shape == (B, W * H, 7 * 7 + int(49 * 0.7))
    assert outputs["prop_maps"].shape == (B, W * H, 32)
    assert bool(jnp.isfinite(outputs["loss"]))
    print("KERNEL_OK")
</pallas_src>

<mosaic_0001>
module attributes {stable_mosaic.version = 11 : i64} {
  func.func @_scores_kernel(%arg0: i32, %arg1: i32, %arg2: memref<1x64x3xf32, #tpu.memory_space<vmem>>, %arg3: memref<1x3x64xf32, #tpu.memory_space<vmem>>, %arg4: memref<3x256xf32, #tpu.memory_space<vmem>>, %arg5: memref<1x256xf32, #tpu.memory_space<vmem>>, %arg6: memref<256x3xf32, #tpu.memory_space<vmem>>, %arg7: memref<256x1xf32, #tpu.memory_space<vmem>>, %arg8: memref<1x64x64xf32, #tpu.memory_space<vmem>>) attributes {dimension_semantics = [#tpu.dimension_semantics<parallel>, #tpu.dimension_semantics<parallel>], iteration_bounds = array<i64: 2, 1>, scalar_prefetch = 0 : i64, scratch_operands = 0 : i64, tpu.core_type = #tpu.core_type<tc>, window_params = [{transform_indices = @transform_0, window_bounds = array<i64: 1, 64, 3>}, {transform_indices = @transform_1, window_bounds = array<i64: 1, 3, 64>}, {pipeline_mode = #tpu.pipeline_mode<synchronous>, transform_indices = @transform_2, window_bounds = array<i64: 3, 256>}, {pipeline_mode = #tpu.pipeline_mode<synchronous>, transform_indices = @transform_3, window_bounds = array<i64: 1, 256>}, {pipeline_mode = #tpu.pipeline_mode<synchronous>, transform_indices = @transform_4, window_bounds = array<i64: 256, 3>}, {pipeline_mode = #tpu.pipeline_mode<synchronous>, transform_indices = @transform_5, window_bounds = array<i64: 256, 1>}, {transform_indices = @transform_6, window_bounds = array<i64: 1, 64, 64>}]} {
    %c0 = arith.constant 0 : index
    %c0_0 = arith.constant 0 : index
    %c0_1 = arith.constant 0 : index
    %0 = vector.load %arg2[%c0, %c0_0, %c0_1] : memref<1x64x3xf32, #tpu.memory_space<vmem>>, vector<1x64x3xf32>
    %1 = vector.shape_cast %0 : vector<1x64x3xf32> to vector<64x3xf32>
    %c0_2 = arith.constant 0 : index
    %c0_3 = arith.constant 0 : index
    %c0_4 = arith.constant 0 : index
    %2 = vector.load %arg3[%c0_2, %c0_3, %c0_4] : memref<1x3x64xf32, #tpu.memory_space<vmem>>, vector<1x3x64xf32>
    %3 = vector.shape_cast %2 : vector<1x3x64xf32> to vector<3x64xf32>
    %4 = vector.extract_strided_slice %1 {offsets = [0, 0], sizes = [64, 1], strides = [1, 1]} : vector<64x3xf32> to vector<64x1xf32>
    %c0_5 = arith.constant 0 : index
    %c0_6 = arith.constant 0 : index
    %5 = vector.load %arg4[%c0_5, %c0_6] : memref<3x256xf32, #tpu.memory_space<vmem>>, vector<1x256xf32>
    %6 = vector.broadcast %4 : vector<64x1xf32> to vector<64x256xf32>
    %7 = vector.broadcast %5 : vector<1x256xf32> to vector<64x256xf32>
    %8 = arith.mulf %6, %7 : vector<64x256xf32>
    %c0_7 = arith.constant 0 : index
    %c0_8 = arith.constant 0 : index
    %9 = vector.load %arg6[%c0_7, %c0_8] : memref<256x3xf32, #tpu.memory_space<vmem>>, vector<256x1xf32>
    %10 = vector.extract_strided_slice %3 {offsets = [0, 0], sizes = [1, 64], strides = [1, 1]} : vector<3x64xf32> to vector<1x64xf32>
    %11 = vector.broadcast %9 : vector<256x1xf32> to vector<256x64xf32>
    %12 = vector.broadcast %10 : vector<1x64xf32> to vector<256x64xf32>
    %13 = arith.mulf %11, %12 : vector<256x64xf32>
    %14 = vector.extract_strided_slice %1 {offsets = [0, 1], sizes = [64, 1], strides = [1, 1]} : vector<64x3xf32> to vector<64x1xf32>
    %c1 = arith.constant 1 : index
    %c0_9 = arith.constant 0 : index
    %15 = vector.load %arg4[%c1, %c0_9] : memref<3x256xf32, #tpu.memory_space<vmem>>, vector<1x256xf32>
    %16 = vector.broadcast %14 : vector<64x1xf32> to vector<64x256xf32>
    %17 = vector.broadcast %15 : vector<1x256xf32> to vector<64x256xf32>
    %18 = arith.mulf %16, %17 : vector<64x256xf32>
    %19 = arith.addf %8, %18 : vector<64x256xf32>
    %c0_10 = arith.constant 0 : index
    %c1_11 = arith.constant 1 : index
    %20 = vector.load %arg6[%c0_10, %c1_11] : memref<256x3xf32, #tpu.memory_space<vmem>>, vector<256x1xf32>
    %21 = vector.extract_strided_slice %3 {offsets = [1, 0], sizes = [1, 64], strides = [1, 1]} : vector<3x64xf32> to vector<1x64xf32>
    %22 = vector.broadcast %20 : vector<256x1xf32> to vector<256x64xf32>
    %23 = vector.broadcast %21 : vector<1x64xf32> to vector<256x64xf32>
    %24 = arith.mulf %22, %23 : vector<256x64xf32>
    %25 = arith.addf %13, %24 : vector<256x64xf32>
    %26 = vector.extract_strided_slice %1 {offsets = [0, 2], sizes = [64, 1], strides = [1, 1]} : vector<64x3xf32> to vector<64x1xf32>
    %c2 = arith.constant 2 : index
    %c0_12 = arith.constant 0 : index
    %27 = vector.load %arg4[%c2, %c0_12] : memref<3x256xf32, #tpu.memory_space<vmem>>, vector<1x256xf32>
    %28 = vector.broadcast %26 : vector<64x1xf32> to vector<64x256xf32>
    %29 = vector.broadcast %27 : vector<1x256xf32> to vector<64x256xf32>
    %30 = arith.mulf %28, %29 : vector<64x256xf32>
    %31 = arith.addf %19, %30 : vector<64x256xf32>
    %c0_13 = arith.constant 0 : index
    %c2_14 = arith.constant 2 : index
    %32 = vector.load %arg6[%c0_13, %c2_14] : memref<256x3xf32, #tpu.memory_space<vmem>>, vector<256x1xf32>
    %33 = vector.extract_strided_slice %3 {offsets = [2, 0], sizes = [1, 64], strides = [1, 1]} : vector<3x64xf32> to vector<1x64xf32>
    %34 = vector.broadcast %32 : vector<256x1xf32> to vector<256x64xf32>
    %35 = vector.broadcast %33 : vector<1x64xf32> to vector<256x64xf32>
    %36 = arith.mulf %34, %35 : vector<256x64xf32>
    %37 = arith.addf %25, %36 : vector<256x64xf32>
    %c0_15 = arith.constant 0 : index
    %c0_16 = arith.constant 0 : index
    %38 = vector.load %arg5[%c0_15, %c0_16] : memref<1x256xf32, #tpu.memory_space<vmem>>, vector<1x256xf32>
    %39 = vector.broadcast %38 : vector<1x256xf32> to vector<64x256xf32>
    %40 = arith.addf %31, %39 : vector<64x256xf32>
    %c0_17 = arith.constant 0 : index
    %c0_18 = arith.constant 0 : index
    %41 = vector.load %arg7[%c0_17, %c0_18] : memref<256x1xf32, #tpu.memory_space<vmem>>, vector<256x1xf32>
    %42 = vector.broadcast %41 : vector<256x1xf32> to vector<256x64xf32>
    %43 = arith.addf %37, %42 : vector<256x64xf32>
    %44 = arith.truncf %40 : vector<64x256xf32> to vector<64x256xbf16>
    %45 = arith.truncf %43 : vector<256x64xf32> to vector<256x64xbf16>
    %cst = arith.constant dense<0.000000e+00> : vector<64x64xf32>
    %46 = tpu.matmul %44, %45, %cst {dimension_numbers = #tpu.dot_dimension_numbers<[1], [0], [0], [1], [0, 0, 1, 1], [], []>} : vector<64x256xbf16>, vector<256x64xbf16>, vector<64x64xf32> -> vector<64x64xf32>
    %cst_19 = arith.constant 0.0870388299 : f32
    %47 = vector.broadcast %cst_19 : f32 to vector<64x64xf32>
    %48 = arith.mulf %46, %47 : vector<64x64xf32>
    %c0_20 = arith.constant 0 : index
    %c0_21 = arith.constant 0 : index
    %c0_22 = arith.constant 0 : index
    %49 = vector.load %arg8[%c0_20, %c0_21, %c0_22] : memref<1x64x64xf32, #tpu.memory_space<vmem>>, vector<1x64x64xf32>
    %50 = vector.shape_cast %49 : vector<1x64x64xf32> to vector<64x64xf32>
    %51 = vector.shape_cast %48 : vector<64x64xf32> to vector<1x64x64xf32>
    tpu.vector_store %arg8[%c0_20, %c0_21, %c0_22], %51 {strides = array<i32>} : memref<1x64x64xf32, #tpu.memory_space<vmem>>, vector<1x64x64xf32>,
    return
  }
  func.func @transform_0(%arg0: i32, %arg1: i32) -> (i32, i32, i32) {
    %c0_i32 = arith.constant 0 : i32
    %c0_i32_0 = arith.constant 0 : i32
    return %arg0, %arg1, %c0_i32 : i32, i32, i32
  }
  func.func @transform_1(%arg0: i32, %arg1: i32) -> (i32, i32, i32) {
    %c0_i32 = arith.constant 0 : i32
    %c0_i32_0 = arith.constant 0 : i32
    %c0_i32_1 = arith.constant 0 : i32
    return %arg0, %c0_i32, %c0_i32_0 : i32, i32, i32
  }
  func.func @transform_2(%arg0: i32, %arg1: i32) -> (i32, i32) {
    %c0_i32 = arith.constant 0 : i32
    %c0_i32_0 = arith.constant 0 : i32
    %c0_i32_1 = arith.constant 0 : i32
    return %c0_i32, %c0_i32_0 : i32, i32
  }
  func.func @transform_3(%arg0: i32, %arg1: i32) -> (i32, i32) {
    %c0_i32 = arith.constant 0 : i32
    %c0_i32_0 = arith.constant 0 : i32
    %c0_i32_1 = arith.constant 0 : i32
    return %c0_i32, %c0_i32_0 : i32, i32
  }
  func.func @transform_4(%arg0: i32, %arg1: i32) -> (i32, i32) {
    %c0_i32 = arith.constant 0 : i32
    %c0_i32_0 = arith.constant 0 : i32
    %c0_i32_1 = arith.constant 0 : i32
    return %c0_i32, %c0_i32_0 : i32, i32
  }
  func.func @transform_5(%arg0: i32, %arg1: i32) -> (i32, i32) {
    %c0_i32 = arith.constant 0 : i32
    %c0_i32_0 = arith.constant 0 : i32
    %c0_i32_1 = arith.constant 0 : i32
    return %c0_i32, %c0_i32_0 : i32, i32
  }
  func.func @transform_6(%arg0: i32, %arg1: i32) -> (i32, i32, i32) {
    %c0_i32 = arith.constant 0 : i32
    %c0_i32_0 = arith.constant 0 : i32
    return %arg0, %arg1, %c0_i32 : i32, i32, i32
  }
}

</mosaic_0001>

<llo_original>
// kernel: tpu_custom_call.1
$region0: #{tpu_custom_call.1}
  #allocation0 [shape = 'u32[]', space=smem, size = 0x4, offset = 0x4, fixed_abs, tag = 'smem constant byte address 0x4 - core index']
  #allocation1 [shape = 'u32[144,128]{1,0:T(1,128)}', space=vmem, size = 0x12000, scoped, tag = 'internal scratch']
  %s0 = inlined_call_operand.vmem [shape: f32[2,64,3], index: 0, kind: input, shape index: {}]
  %s1 = inlined_call_operand.vmem [shape: f32[2,3,64], index: 1, kind: input, shape index: {}]
  %s2 = inlined_call_operand.vmem [shape: f32[3,256], index: 2, kind: input, shape index: {}]
  %s3 = inlined_call_operand.vmem [shape: f32[1,256], index: 3, kind: input, shape index: {}]
  %s4 = inlined_call_operand.vmem [shape: f32[256,3], index: 4, kind: input, shape index: {}]
  %s5 = inlined_call_operand.vmem [shape: f32[256,1], index: 5, kind: input, shape index: {}]
  %s6 = inlined_call_operand.hbm [shape: f32[2,64,64], index: 6, kind: output, shape index: {}]
  %s7 = sld [smem:[#allocation0]]
  $region57: #{tpu_custom_call.1} parent=0
    _
  %s9 = ssub.s32 1, %s7
  %s10 = scalar_select 0, %s9, %s7
  $region1: #{tpu_custom_call.1} parent=0
    #allocation2 [shape = 'u8[65536]{0}', space=vmem, size = 0x10000, scoped, tag = 'output window, operand 0']
    #allocation3 [shape = 's32[2]{0}', space=sflag, size = 0x8, scoped, tag = 'scoped memory for tpu_custom_call.1']
    %11 = vsyncpa [#allocation3], 0
    %s12 = scalar_lea.sflag [#allocation3], 1
    %13 = vsyncpa %s12, 0
    loop: start=0, step=1, limit=4
    $region2: #{tpu_custom_call.1} parent=1 // loop_pre_header
      _
    $region3: #{tpu_custom_call.1} parent=1 // loop_header
      %s15 = sphi 0, %s19
      %p16 = scmp.ge.s32.totalorder %s15, 4
      %s22 = sphi 0, %s34
      %s23 = sphi 0, %s30
      %s24 = sphi 0, %s22
      %s25 = sphi 0, %s23
      %s26 = sphi 0, %s24
      %s27 = sphi 0, %s25
      %s39 = sphi 0, %s41
      %s42 = sphi 0, %s39
      %s43 = sphi 0, %s42
      %s59 = sphi 0, %s43
      %s65 = sphi 0, %s67
      %s68 = sphi 0, %s65
      %s69 = sphi 0, %s68
      %s85 = sphi 0, %s69
      %s89 = sphi 0, %s89
      %s91 = sphi 0, %s89
      %s92 = sphi 0, %s91
      %s106 = sphi 0, %s92
      %s110 = sphi 0, %s110
      %s112 = sphi 0, %s110
      %s113 = sphi 0, %s112
      %s127 = sphi 0, %s113
      %s131 = sphi 0, %s131
      %s133 = sphi 0, %s131
      %s134 = sphi 0, %s133
      %s148 = sphi 0, %s134
      %s152 = sphi 0, %s152
      %s154 = sphi 0, %s152
      %s155 = sphi 0, %s154
      %s169 = sphi 0, %s155
      %s177 = sphi 0, %s179
      %s180 = sphi 0, %s177
      %s181 = sphi 0, %s180
      %s197 = sphi 0, %s181
    $region4: #{tpu_custom_call.1} parent=1 // loop_header_branch
      %18 = sbr.rel (%p16) target = $region8
    $region5: #{tpu_custom_call.1} parent=1 // loop_body
      %s20 = ssub.s32 %s15, 1
      %s21 = ssub.s32 %s15, 2
      %s28 = sadd.s32 1, %s23
      %p29 = scmp.ge.s32.totalorder %s28, 1
      %s30 = scalar_select %p29, 0, %s28
      %s31 = sadd.s32 1, %s22
      %s32 = scalar_select %p29, %s31, %s22
      %p33 = scmp.ge.s32.totalorder %s32, 2
      %s34 = scalar_select %p33, 0, %s32
      %s35 = ssub.s32 %s22, %s34
      %s36 = ssub.s32 %s23, %s30
      %s37 = sor.u32 %s35, %s36
      %p38 = scmp.eq.s32.totalorder %s37, 0
      %s40 = sadd.s32 %s39, 1
      %s41 = scalar_select %p38, %s39, %s40
      %p44 = pneg %p38
      %p45 = scmp.eq.s32.totalorder %s15, 1
      %p46 = por %p44, %p45
      %p47 = scmp.ne.s32.totalorder %s39, %s42
      %p48 = scmp.eq.s32.totalorder %s15, 0
      %p49 = por %p47, %p48
      %p50 = scmp.ne.s32.totalorder %s39, %s42
      %p51 = scmp.eq.s32.totalorder %s20, 1
      %p52 = por %p50, %p51
      %p53 = scmp.ne.s32.totalorder %s42, %s43
      %p54 = scmp.eq.s32.totalorder %s20, 0
      %p55 = por %p53, %p54
      %p56 = scmp.ne.s32.totalorder %s42, %s43
      %p57 = scmp.eq.s32.totalorder %s21, 1
      %p58 = por %p56, %p57
      %p60 = scmp.ne.s32.totalorder %s43, %s59
      %p61 = scmp.eq.s32.totalorder %s21, 0
      %p62 = por %p60, %p61
      %s63 = ssub.s32 %s22, %s34
      %p64 = scmp.eq.s32.totalorder %s63, 0
      %s66 = sadd.s32 %s65, 1
      %s67 = scalar_select %p64, %s65, %s66
      %p70 = pneg %p64
      %p71 = scmp.eq.s32.totalorder %s15, 1
      %p72 = por %p70, %p71
      %p73 = scmp.ne.s32.totalorder %s65, %s68
      %p74 = scmp.eq.s32.totalorder %s15, 0
      %p75 = por %p73, %p74
      %p76 = scmp.ne.s32.totalorder %s65, %s68
      %p77 = scmp.eq.s32.totalorder %s20, 1
      %p78 = por %p76, %p77
      %p79 = scmp.ne.s32.totalorder %s68, %s69
      %p80 = scmp.eq.s32.totalorder %s20, 0
      %p81 = por %p79, %p80
      %p82 = scmp.ne.s32.totalorder %s68, %s69
      %p83 = scmp.eq.s32.totalorder %s21, 1
      %p84 = por %p82, %p83
      %p86 = scmp.ne.s32.totalorder %s69, %s85
      %p87 = scmp.eq.s32.totalorder %s21, 0
      %p88 = por %p86, %p87
      %s90 = sadd.s32 %s89, 1
      %p93 = scmp.eq.s32.totalorder %s15, 1
      %p94 = scmp.ne.s32.totalorder %s89, %s91
      %p95 = scmp.eq.s32.totalorder %s15, 0
      %p96 = por %p94, %p95
      %p97 = scmp.ne.s32.totalorder %s89, %s91
      %p98 = scmp.eq.s32.totalorder %s20, 1
      %p99 = por %p97, %p98
      %p100 = scmp.ne.s32.totalorder %s91, %s92
      %p101 = scmp.eq.s32.totalorder %s20, 0
      %p102 = por %p100, %p101
      %p103 = scmp.ne.s32.totalorder %s91, %s92
      %p104 = scmp.eq.s32.totalorder %s21, 1
      %p105 = por %p103, %p104
      %p107 = scmp.ne.s32.totalorder %s92, %s106
      %p108 = scmp.eq.s32.totalorder %s21, 0
      %p109 = por %p107, %p108
      %s111 = sadd.s32 %s110, 1
      %p114 = scmp.eq.s32.totalorder %s15, 1
      %p115 = scmp.ne.s32.totalorder %s110, %s112
      %p116 = scmp.eq.s32.totalorder %s15, 0
      %p117 = por %p115, %p116
      %p118 = scmp.ne.s32.totalorder %s110, %s112
      %p119 = scmp.eq.s32.totalorder %s20, 1
      %p120 = por %p118, %p119
      %p121 = scmp.ne.s32.totalorder %s112, %s113
      %p122 = scmp.eq.s32.totalorder %s20, 0
      %p123 = por %p121, %p122
      %p124 = scmp.ne.s32.totalorder %s112, %s113
      %p125 = scmp.eq.s32.totalorder %s21, 1
      %p126 = por %p124, %p125
      %p128 = scmp.ne.s32.totalorder %s113, %s127
      %p129 = scmp.eq.s32.totalorder %s21, 0
      %p130 = por %p128, %p129
      %s132 = sadd.s32 %s131, 1
      %p135 = scmp.eq.s32.totalorder %s15, 1
      %p136 = scmp.ne.s32.totalorder %s131, %s133
      %p137 = scmp.eq.s32.totalorder %s15, 0
      %p138 = por %p136, %p137
      %p139 = scmp.ne.s32.totalorder %s131, %s133
      %p140 = scmp.eq.s32.totalorder %s20, 1
      %p141 = por %p139, %p140
      %p142 = scmp.ne.s32.totalorder %s133, %s134
      %p143 = scmp.eq.s32.totalorder %s20, 0
      %p144 = por %p142, %p143
      %p145 = scmp.ne.s32.totalorder %s133, %s134
      %p146 = scmp.eq.s32.totalorder %s21, 1
      %p147 = por %p145, %p146
      %p149 = scmp.ne.s32.totalorder %s134, %s148
      %p150 = scmp.eq.s32.totalorder %s21, 0
      %p151 = por %p149, %p150
      %s153 = sadd.s32 %s152, 1
      %p156 = scmp.eq.s32.totalorder %s15, 1
      %p157 = scmp.ne.s32.totalorder %s152, %s154
      %p158 = scmp.eq.s32.totalorder %s15, 0
      %p159 = por %p157, %p158
      %p160 = scmp.ne.s32.totalorder %s152, %s154
      %p161 = scmp.eq.s32.totalorder %s20, 1
      %p162 = por %p160, %p161
      %p163 = scmp.ne.s32.totalorder %s154, %s155
      %p164 = scmp.eq.s32.totalorder %s20, 0
      %p165 = por %p163, %p164
      %p166 = scmp.ne.s32.totalorder %s154, %s155
      %p167 = scmp.eq.s32.totalorder %s21, 1
      %p168 = por %p166, %p167
      %p170 = scmp.ne.s32.totalorder %s155, %s169
      %p171 = scmp.eq.s32.totalorder %s21, 0
      %p172 = por %p170, %p171
      %s173 = ssub.s32 %s22, %s34
      %s174 = ssub.s32 %s23, %s30
      %s175 = sor.u32 %s173, %s174
      %p176 = scmp.eq.s32.totalorder %s175, 0
      %s178 = sadd.s32 %s177, 1
      %s179 = scalar_select %p176, %s177, %s178
      %p182 = pneg %p176
      %p183 = scmp.eq.s32.totalorder %s15, 1
      %p184 = por %p182, %p183
      %p185 = scmp.ne.s32.totalorder %s177, %s180
      %p186 = scmp.eq.s32.totalorder %s15, 0
      %p187 = por %p185, %p186
      %p188 = scmp.ne.s32.totalorder %s177, %s180
      %p189 = scmp.eq.s32.totalorder %s20, 1
      %p190 = por %p188, %p189
      %p191 = scmp.ne.s32.totalorder %s180, %s181
      %p192 = scmp.eq.s32.totalorder %s20, 0
      %p193 = por %p191, %p192
      %p194 = scmp.ne.s32.totalorder %s180, %s181
      %p195 = scmp.eq.s32.totalorder %s21, 1
      %p196 = por %p194, %p195
      %p198 = scmp.ne.s32.totalorder %s181, %s197
      %p199 = scmp.eq.s32.totalorder %s21, 0
      %p200 = por %p198, %p199
      %p201 = scmp.le.s32.totalorder 1, %s15
      %p202 = scmp.lt.s32.totalorder %s15, 3
      %p203 = pnand %p201, %p202
      %p204 = pneg %p203
      // Predicated region
      $region9: #{tpu_custom_call.1} parent=5 // pred_check
        _
      $region10: #{tpu_custom_call.1} parent=5 // pred_check_branch
        %206 = sbr.rel (%p203) target = $region12
      $region11: #{tpu_custom_call.1} parent=5 // pred_region
        %s207 = ssub.s32 %s15, 1
        // Predicated region
        $region13: #{tpu_custom_call.1} parent=11 // pred_check
          %p208 = pneg %p102
        $region14: #{tpu_custom_call.1} parent=11 // pred_check_branch
          %210 = sbr.rel (%p208) target = $region16
        $region15: #{tpu_custom_call.1} parent=11 // pred_region
          _
        $region16: #{tpu_custom_call.1} parent=11 // pred_fallthru
          _
        // Predicated region
        $region17: #{tpu_custom_call.1} parent=11 // pred_check
          %p211 = pneg %p123
        $region18: #{tpu_custom_call.1} parent=11 // pred_check_branch
          %213 = sbr.rel (%p211) target = $region20
        $region19: #{tpu_custom_call.1} parent=11 // pred_region
          _
        $region20: #{tpu_custom_call.1} parent=11 // pred_fallthru
          _
        // Predicated region
        $region21: #{tpu_custom_call.1} parent=11 // pred_check
          %p214 = pneg %p144
        $region22: #{tpu_custom_call.1} parent=11 // pred_check_branch
          %216 = sbr.rel (%p214) target = $region24
        $region23: #{tpu_custom_call.1} parent=11 // pred_region
          _
        $region24: #{tpu_custom_call.1} parent=11 // pred_fallthru
          _
        // Predicated region
        $region25: #{tpu_custom_call.1} parent=11 // pred_check
          %p217 = pneg %p165
        $region26: #{tpu_custom_call.1} parent=11 // pred_check_branch
          %219 = sbr.rel (%p217) target = $region28
        $region27: #{tpu_custom_call.1} parent=11 // pred_region
          _
        $region28: #{tpu_custom_call.1} parent=11 // pred_fallthru
          _
      $region12: #{tpu_custom_call.1} parent=5 // pred_fallthru
        _
      %p220 = scmp.lt.s32.totalorder %s15, 2
      // Predicated region
      $region29: #{tpu_custom_call.1} parent=5 // pred_check
        %p221 = pneg %p220
      $region30: #{tpu_custom_call.1} parent=5 // pred_check_branch
        %223 = sbr.rel (%p221) target = $region32
      $region31: #{tpu_custom_call.1} parent=5 // pred_region
        // Predicated region
        $region33: #{tpu_custom_call.1} parent=31 // pred_check
          %p224 = pneg %p49
        $region34: #{tpu_custom_call.1} parent=31 // pred_check_branch
          %226 = sbr.rel (%p224) target = $region36
        $region35: #{tpu_custom_call.1} parent=31 // pred_region
          %s227 = smul.u32 8, %s23
          %p228 = scmp.lt.s32.totalorder %s22, 1
          %s229 = scalar_select %p228, %s22, 1
          %p230 = scmp.lt.s32.totalorder %s227, 7
          %s231 = scalar_select %p230, %s227, 7
          %s232 = smul.addr %s229, 8
          %s233 = sadd.s32 %s231, %s232
          %s234 = smul.addr %s233, 8
          %s235 = scalar_lea.vmem %s0, %s234
          %s236 = smul.u32 8, %s23
        $region36: #{tpu_custom_call.1} parent=31 // pred_fallthru
          _
        // Predicated region
        $region37: #{tpu_custom_call.1} parent=31 // pred_check
          %p237 = pneg %p75
        $region38: #{tpu_custom_call.1} parent=31 // pred_check_branch
          %239 = sbr.rel (%p237) target = $region40
        $region39: #{tpu_custom_call.1} parent=31 // pred_region
          %p240 = scmp.lt.s32.totalorder %s22, 1
          %s241 = scalar_select %p240, %s22, 1
          %s242 = smul.addr %s241, 4
          %s243 = scalar_lea.vmem %s1, %s242
        $region40: #{tpu_custom_call.1} parent=31 // pred_fallthru
          _
      $region32: #{tpu_custom_call.1} parent=5 // pred_fallthru
        _
      %p244 = scmp.le.s32.totalorder 1, %s15
      %p245 = scmp.lt.s32.totalorder %s15, 3
      %p246 = pnand %p244, %p245
      %p247 = pneg %p246
      // Predicated region
      $region41: #{tpu_custom_call.1} parent=5 // pred_check
        _
      $region42: #{tpu_custom_call.1} parent=5 // pred_check_branch
        %249 = sbr.rel (%p246) target = $region44
      $region43: #{tpu_custom_call.1} parent=5 // pred_region
        %s250 = ssub.s32 %s15, 1
        %s251 = smul.u32 8, %s25
        %p252 = scmp.lt.s32.totalorder %s24, 1
        %s253 = scalar_select %p252, %s24, 1
        %p254 = scmp.lt.s32.totalorder %s251, 7
        %s255 = scalar_select %p254, %s251, 7
        %s256 = smul.addr %s253, 8
        %s257 = sadd.s32 %s255, %s256
        %s258 = smul.addr %s257, 8
        %s259 = scalar_lea.vmem %s0, %s258
        %p260 = pneg %p55
        %p261 = pneg %p52
        %p262 = scmp.lt.s32.totalorder %s24, 1
        %s263 = scalar_select %p262, %s24, 1
        %s264 = smul.addr %s263, 4
        %s265 = scalar_lea.vmem %s1, %s264
        %p266 = pneg %p81
        %p267 = pneg %p78
        %p268 = pneg %p102
        %p269 = pneg %p99
        %p270 = pneg %p123
        %p271 = pneg %p120
        %p272 = pneg %p144
        %p273 = pneg %p141
        %p274 = pneg %p165
        %p275 = pneg %p162
        %p276 = pneg %p193
        %p277 = pneg %p190
        %s278 = sand.u32 %s180, 1
        %s279 = scalar_lea.sflag [#allocation3], %s278
        %s280 = sand.u32 %s180, 1
        %s281 = smul.addr %s280, 64
        %s282 = scalar_lea.vmem [#allocation2], %s281
        %s283 = smul.u32 8, %s25
        %p284 = scmp.lt.s32.totalorder %s24, 1
        %s285 = scalar_select %p284, %s24, 1
        %p286 = scmp.lt.s32.totalorder %s283, 7
        %s287 = scalar_select %p286, %s283, 7
        %s288 = smul.addr %s285, 8
        %s289 = sadd.s32 %s287, %s288
        %s290 = smul.addr %s289, 8
        %s291 = scalar_lea.vmem %s0, %s290
        %s292 = smul.u32 8, %s25
        %p293 = scmp.lt.s32.totalorder %s24, 1
        %s294 = scalar_select %p293, %s24, 1
        %s295 = smul.addr %s294, 4
        %s296 = scalar_lea.vmem %s1, %s295
        %s297 = smul.u32 8, %s25
        %v299 = vld [vmem:[%s291] sm:$0xff]
        %v300 = vld [vmem:[%s291 + $0x8] sm:$0xff]
        %v301 = vld [vmem:[%s291 + $0x10] sm:$0xff]
        %v302 = vld [vmem:[%s291 + $0x18] sm:$0xff]
        %v303 = vld [vmem:[%s291 + $0x20] sm:$0xff]
        %v304 = vld [vmem:[%s291 + $0x28] sm:$0xff]
        %v305 = vld [vmem:[%s291 + $0x30] sm:$0xff]
        %v306 = vld [vmem:[%s291 + $0x38] sm:$0xff]
        %v307 = vld [vmem:[%s296] sm:$0x7]
        %v308 = vld [vmem:[%s2] ss:$4 sm:$0x3]
        %310 = vset.pattern.permute.xlu0 0
        %311 = vperm.xlu0 %310, %v299
        %v312 = vpop.permute.xlu0 %311
        %315 = vset.pattern.permute.xlu0 0
        %316 = vperm.xlu0 %315, %v300
        %v317 = vpop.permute.xlu0 %316
        %320 = vset.pattern.permute.xlu0 0
        %321 = vperm.xlu0 %320, %v301
        %v322 = vpop.permute.xlu0 %321
        %325 = vset.pattern.permute.xlu0 0
        %326 = vperm.xlu0 %325, %v302
        %v327 = vpop.permute.xlu0 %326
        %330 = vset.pattern.permute.xlu0 0
        %331 = vperm.xlu0 %330, %v303
        %v332 = vpop.permute.xlu0 %331
        %335 = vset.pattern.permute.xlu0 0
        %336 = vperm.xlu0 %335, %v304
        %v337 = vpop.permute.xlu0 %336
        %340 = vset.pattern.permute.xlu0 0
        %341 = vperm.xlu0 %340, %v305
        %v342 = vpop.permute.xlu0 %341
        %345 = vset.pattern.permute.xlu0 0
        %346 = vperm.xlu0 %345, %v306
        %v347 = vpop.permute.xlu0 %346
        %v350 = vlaneseq
        %v351 = vshrl.u32 %v350, 7
        %v352 = vsub.s32 0, %v351
        %v353 = vrot.slane %v308, %v352
        %v354 = vlaneseq
        %v355 = vshrl.u32 %v354, 7
        %v356 = vsub.s32 1, %v355
        %v357 = vrot.slane %v308, %v356
        %v360 = vmul.f32 %v312, %v353
        %v361 = vmul.f32 %v312, %v357
        %v362 = vmul.f32 %v317, %v353
        %v363 = vmul.f32 %v317, %v357
        %v364 = vmul.f32 %v322, %v353
        %v365 = vmul.f32 %v322, %v357
        %v366 = vmul.f32 %v327, %v353
        %v367 = vmul.f32 %v327, %v357
        %v368 = vmul.f32 %v332, %v353
        %v369 = vmul.f32 %v332, %v357
        %v370 = vmul.f32 %v337, %v353
        %v371 = vmul.f32 %v337, %v357
        %v372 = vmul.f32 %v342, %v353
        %v373 = vmul.f32 %v342, %v357
        %v374 = vmul.f32 %v347, %v353
        %v375 = vmul.f32 %v347, %v357
        %v376 = vld [vmem:[%s4] sm:$0xff]
        %v377 = vld [vmem:[%s4 + $0x8] sm:$0xff]
        %v378 = vld [vmem:[%s4 + $0x10] sm:$0xff]
        %v379 = vld [vmem:[%s4 + $0x18] sm:$0xff]
        %v380 = vld [vmem:[%s4 + $0x20] sm:$0xff]
        %v381 = vld [vmem:[%s4 + $0x28] sm:$0xff]
        %v382 = vld [vmem:[%s4 + $0x30] sm:$0xff]
        %v383 = vld [vmem:[%s4 + $0x38] sm:$0xff]
        %v384 = vld [vmem:[%s4 + $0x40] sm:$0xff]
        %v385 = vld [vmem:[%s4 + $0x48] sm:$0xff]
        %v386 = vld [vmem:[%s4 + $0x50] sm:$0xff]
        %v387 = vld [vmem:[%s4 + $0x58] sm:$0xff]
        %v388 = vld [vmem:[%s4 + $0x60] sm:$0xff]
        %v389 = vld [vmem:[%s4 + $0x68] sm:$0xff]
        %v390 = vld [vmem:[%s4 + $0x70] sm:$0xff]
        %v391 = vld [vmem:[%s4 + $0x78] sm:$0xff]
        %v392 = vld [vmem:[%s4 + $0x80] sm:$0xff]
        %v393 = vld [vmem:[%s4 + $0x88] sm:$0xff]
        %v394 = vld [vmem:[%s4 + $0x90] sm:$0xff]
        %v395 = vld [vmem:[%s4 + $0x98] sm:$0xff]
        %v396 = vld [vmem:[%s4 + $0xa0] sm:$0xff]
        %v397 = vld [vmem:[%s4 + $0xa8] sm:$0xff]
        %v398 = vld [vmem:[%s4 + $0xb0] sm:$0xff]
        %v399 = vld [vmem:[%s4 + $0xb8] sm:$0xff]
        %v400 = vld [vmem:[%s4 + $0xc0] sm:$0xff]
        %v401 = vld [vmem:[%s4 + $0xc8] sm:$0xff]
        %v402 = vld [vmem:[%s4 + $0xd0] sm:$0xff]
        %v403 = vld [vmem:[%s4 + $0xd8] sm:$0xff]
        %v404 = vld [vmem:[%s4 + $0xe0] sm:$0xff]
        %v405 = vld [vmem:[%s4 + $0xe8] sm:$0xff]
        %v406 = vld [vmem:[%s4 + $0xf0] sm:$0xff]
        %v407 = vld [vmem:[%s4 + $0xf8] sm:$0xff]
        %409 = vset.pattern.permute.xlu0 0
        %410 = vperm.xlu0 %409, %v376
        %v411 = vpop.permute.xlu0 %410
        %414 = vset.pattern.permute.xlu0 0
        %415 = vperm.xlu0 %414, %v377
        %v416 = vpop.permute.xlu0 %415
        %419 = vset.pattern.permute.xlu0 0
        %420 = vperm.xlu0 %419, %v378
        %v421 = vpop.permute.xlu0 %420
        %424 = vset.pattern.permute.xlu0 0
        %425 = vperm.xlu0 %424, %v379
        %v426 = vpop.permute.xlu0 %425
        %429 = vset.pattern.permute.xlu0 0
        %430 = vperm.xlu0 %429, %v380
        %v431 = vpop.permute.xlu0 %430
        %434 = vset.pattern.permute.xlu0 0
        %435 = vperm.xlu0 %434, %v381
        %v436 = vpop.permute.xlu0 %435
        %439 = vset.pattern.permute.xlu0 0
        %440 = vperm.xlu0 %439, %v382
        %v441 = vpop.permute.xlu0 %440
        %444 = vset.pattern.permute.xlu0 0
        %445 = vperm.xlu0 %444, %v383
        %v446 = vpop.permute.xlu0 %445
        %449 = vset.pattern.permute.xlu0 0
        %450 = vperm.xlu0 %449, %v384
        %v451 = vpop.permute.xlu0 %450
        %454 = vset.pattern.permute.xlu0 0
        %455 = vperm.xlu0 %454, %v385
        %v456 = vpop.permute.xlu0 %455
        %459 = vset.pattern.permute.xlu0 0
        %460 = vperm.xlu0 %459, %v386
        %v461 = vpop.permute.xlu0 %460
        %464 = vset.pattern.permute.xlu0 0
        %465 = vperm.xlu0 %464, %v387
        %v466 = vpop.permute.xlu0 %465
        %469 = vset.pattern.permute.xlu0 0
        %470 = vperm.xlu0 %469, %v388
        %v471 = vpop.permute.xlu0 %470
        %474 = vset.pattern.permute.xlu0 0
        %475 = vperm.xlu0 %474, %v389
        %v476 = vpop.permute.xlu0 %475
        %479 = vset.pattern.permute.xlu0 0
        %480 = vperm.xlu0 %479, %v390
        %v481 = vpop.permute.xlu0 %480
        %484 = vset.pattern.permute.xlu0 0
        %485 = vperm.xlu0 %484, %v391
        %v486 = vpop.permute.xlu0 %485
        %489 = vset.pattern.permute.xlu0 0
        %490 = vperm.xlu0 %489, %v392
        %v491 = vpop.permute.xlu0 %490
        %494 = vset.pattern.permute.xlu0 0
        %495 = vperm.xlu0 %494, %v393
        %v496 = vpop.permute.xlu0 %495
        %499 = vset.pattern.permute.xlu0 0
        %500 = vperm.xlu0 %499, %v394
        %v501 = vpop.permute.xlu0 %500
        %504 = vset.pattern.permute.xlu0 0
        %505 = vperm.xlu0 %504, %v395
        %v506 = vpop.permute.xlu0 %505
        %509 = vset.pattern.permute.xlu0 0
        %510 = vperm.xlu0 %509, %v396
        %v511 = vpop.permute.xlu0 %510
        %514 = vset.pattern.permute.xlu0 0
        %515 = vperm.xlu0 %514, %v397
        %v516 = vpop.permute.xlu0 %515
        %519 = vset.pattern.permute.xlu0 0
        %520 = vperm.xlu0 %519, %v398
        %v521 = vpop.permute.xlu0 %520
        %524 = vset.pattern.permute.xlu0 0
        %525 = vperm.xlu0 %524, %v399
        %v526 = vpop.permute.xlu0 %525
        %529 = vset.pattern.permute.xlu0 0
        %530 = vperm.xlu0 %529, %v400
        %v531 = vpop.permute.xlu0 %530
        %534 = vset.pattern.permute.xlu0 0
        %535 = vperm.xlu0 %534, %v401
        %v536 = vpop.permute.xlu0 %535
        %539 = vset.pattern.permute.xlu0 0
        %540 = vperm.xlu0 %539, %v402
        %v541 = vpop.permute.xlu0 %540
        %544 = vset.pattern.permute.xlu0 0
        %545 = vperm.xlu0 %544, %v403
        %v546 = vpop.permute.xlu0 %545
        %549 = vset.pattern.permute.xlu0 0
        %550 = vperm.xlu0 %549, %v404
        %v551 = vpop.permute.xlu0 %550
        %554 = vset.pattern.permute.xlu0 0
        %555 = vperm.xlu0 %554, %v405
        %v556 = vpop.permute.xlu0 %555
        %559 = vset.pattern.permute.xlu0 0
        %560 = vperm.xlu0 %559, %v406
        %v561 = vpop.permute.xlu0 %560
        %564 = vset.pattern.permute.xlu0 0
        %565 = vperm.xlu0 %564, %v407
        %v566 = vpop.permute.xlu0 %565
        %v568 = vlaneseq
        %v569 = vshrl.u32 %v568, 7
        %v570 = vsub.s32 0, %v569
        %v571 = vrot.slane %v307, %v570
        %v572 = vmul.f32 %v411, %v571
        %v573 = vmul.f32 %v416, %v571
        %v574 = vmul.f32 %v421, %v571
        %v575 = vmul.f32 %v426, %v571
        %v576 = vmul.f32 %v431, %v571
        %v577 = vmul.f32 %v436, %v571
        %v578 = vmul.f32 %v441, %v571
        %v579 = vmul.f32 %v446, %v571
        %v580 = vmul.f32 %v451, %v571
        %v581 = vmul.f32 %v456, %v571
        %v582 = vmul.f32 %v461, %v571
        %v583 = vmul.f32 %v466, %v571
        %v584 = vmul.f32 %v471, %v571
        %v585 = vmul.f32 %v476, %v571
        %v586 = vmul.f32 %v481, %v571
        %v587 = vmul.f32 %v486, %v571
        %v588 = vmul.f32 %v491, %v571
        %v589 = vmul.f32 %v496, %v571
        %v590 = vmul.f32 %v501, %v571
        %v591 = vmul.f32 %v506, %v571
        %v592 = vmul.f32 %v511, %v571
        %v593 = vmul.f32 %v516, %v571
        %v594 = vmul.f32 %v521, %v571
        %v595 = vmul.f32 %v526, %v571
        %v596 = vmul.f32 %v531, %v571
        %v597 = vmul.f32 %v536, %v571
        %v598 = vmul.f32 %v541, %v571
        %v599 = vmul.f32 %v546, %v571
        %v600 = vmul.f32 %v551, %v571
        %v601 = vmul.f32 %v556, %v571
        %v602 = vmul.f32 %v561, %v571
        %v603 = vmul.f32 %v566, %v571
        %s604 = scalar_lea.vmem %s2, 1
        %v605 = vld [vmem:[%s604] ss:$4 sm:$0x3]
        %606 = vset.pattern.permute.xlu0 1
        %607 = vperm.xlu0 %606, %v299
        %v608 = vpop.permute.xlu0 %607
        %610 = vset.pattern.permute.xlu0 1
        %611 = vperm.xlu0 %610, %v300
        %v612 = vpop.permute.xlu0 %611
        %614 = vset.pattern.permute.xlu0 1
        %615 = vperm.xlu0 %614, %v301
        %v616 = vpop.permute.xlu0 %615
        %618 = vset.pattern.permute.xlu0 1
        %619 = vperm.xlu0 %618, %v302
        %v620 = vpop.permute.xlu0 %619
        %622 = vset.pattern.permute.xlu0 1
        %623 = vperm.xlu0 %622, %v303
        %v624 = vpop.permute.xlu0 %623
        %626 = vset.pattern.permute.xlu0 1
        %627 = vperm.xlu0 %626, %v304
        %v628 = vpop.permute.xlu0 %627
        %630 = vset.pattern.permute.xlu0 1
        %631 = vperm.xlu0 %630, %v305
        %v632 = vpop.permute.xlu0 %631
        %634 = vset.pattern.permute.xlu0 1
        %635 = vperm.xlu0 %634, %v306
        %v636 = vpop.permute.xlu0 %635
        %v639 = vlaneseq
        %v640 = vshrl.u32 %v639, 7
        %v641 = vsub.s32 0, %v640
        %v642 = vrot.slane %v605, %v641
        %v643 = vlaneseq
        %v644 = vshrl.u32 %v643, 7
        %v645 = vsub.s32 1, %v644
        %v646 = vrot.slane %v605, %v645
        %v649 = vmul.f32 %v608, %v642
        %v650 = vmul.f32 %v608, %v646
        %v651 = vmul.f32 %v612, %v642
        %v652 = vmul.f32 %v612, %v646
        %v653 = vmul.f32 %v616, %v642
        %v654 = vmul.f32 %v616, %v646
        %v655 = vmul.f32 %v620, %v642
        %v656 = vmul.f32 %v620, %v646
        %v657 = vmul.f32 %v624, %v642
        %v658 = vmul.f32 %v624, %v646
        %v659 = vmul.f32 %v628, %v642
        %v660 = vmul.f32 %v628, %v646
        %v661 = vmul.f32 %v632, %v642
        %v662 = vmul.f32 %v632, %v646
        %v663 = vmul.f32 %v636, %v642
        %v664 = vmul.f32 %v636, %v646
        %v665 = vadd.f32 %v360, %v649
        %v666 = vadd.f32 %v361, %v650
        %v667 = vadd.f32 %v362, %v651
        %v668 = vadd.f32 %v363, %v652
        %v669 = vadd.f32 %v364, %v653
        %v670 = vadd.f32 %v365, %v654
        %v671 = vadd.f32 %v366, %v655
        %v672 = vadd.f32 %v367, %v656
        %v673 = vadd.f32 %v368, %v657
        %v674 = vadd.f32 %v369, %v658
        %v675 = vadd.f32 %v370, %v659
        %v676 = vadd.f32 %v371, %v660
        %v677 = vadd.f32 %v372, %v661
        %v678 = vadd.f32 %v373, %v662
        %v679 = vadd.f32 %v374, %v663
        %v680 = vadd.f32 %v375, %v664
        %681 = vset.pattern.permute.xlu0 1
        %682 = vperm.xlu0 %681, %v376
        %v683 = vpop.permute.xlu0 %682
        %685 = vset.pattern.permute.xlu0 1
        %686 = vperm.xlu0 %685, %v377
        %v687 = vpop.permute.xlu0 %686
        %689 = vset.pattern.permute.xlu0 1
        %690 = vperm.xlu0 %689, %v378
        %v691 = vpop.permute.xlu0 %690
        %693 = vset.pattern.permute.xlu0 1
        %694 = vperm.xlu0 %693, %v379
        %v695 = vpop.permute.xlu0 %694
        %697 = vset.pattern.permute.xlu0 1
        %698 = vperm.xlu0 %697, %v380
        %v699 = vpop.permute.xlu0 %698
        %701 = vset.pattern.permute.xlu0 1
        %702 = vperm.xlu0 %701, %v381
        %v703 = vpop.permute.xlu0 %702
        %705 = vset.pattern.permute.xlu0 1
        %706 = vperm.xlu0 %705, %v382
        %v707 = vpop.permute.xlu0 %706
        %709 = vset.pattern.permute.xlu0 1
        %710 = vperm.xlu0 %709, %v383
        %v711 = vpop.permute.xlu0 %710
        %713 = vset.pattern.permute.xlu0 1
        %714 = vperm.xlu0 %713, %v384
        %v715 = vpop.permute.xlu0 %714
        %717 = vset.pattern.permute.xlu0 1
        %718 = vperm.xlu0 %717, %v385
        %v719 = vpop.permute.xlu0 %718
        %721 = vset.pattern.permute.xlu0 1
        %722 = vperm.xlu0 %721, %v386
        %v723 = vpop.permute.xlu0 %722
        %725 = vset.pattern.permute.xlu0 1
        %726 = vperm.xlu0 %725, %v387
        %v727 = vpop.permute.xlu0 %726
        %729 = vset.pattern.permute.xlu0 1
        %730 = vperm.xlu0 %729, %v388
        %v731 = vpop.permute.xlu0 %730
        %733 = vset.pattern.permute.xlu0 1
        %734 = vperm.xlu0 %733, %v389
        %v735 = vpop.permute.xlu0 %734
        %737 = vset.pattern.permute.xlu0 1
        %738 = vperm.xlu0 %737, %v390
        %v739 = vpop.permute.xlu0 %738
        %741 = vset.pattern.permute.xlu0 1
        %742 = vperm.xlu0 %741, %v391
        %v743 = vpop.permute.xlu0 %742
        %745 = vset.pattern.permute.xlu0 1
        %746 = vperm.xlu0 %745, %v392
        %v747 = vpop.permute.xlu0 %746
        %749 = vset.pattern.permute.xlu0 1
        %750 = vperm.xlu0 %749, %v393
        %v751 = vpop.permute.xlu0 %750
        %753 = vset.pattern.permute.xlu0 1
        %754 = vperm.xlu0 %753, %v394
        %v755 = vpop.permute.xlu0 %754
        %757 = vset.pattern.permute.xlu0 1
        %758 = vperm.xlu0 %757, %v395
        %v759 = vpop.permute.xlu0 %758
        %761 = vset.pattern.permute.xlu0 1
        %762 = vperm.xlu0 %761, %v396
        %v763 = vpop.permute.xlu0 %762
        %765 = vset.pattern.permute.xlu0 1
        %766 = vperm.xlu0 %765, %v397
        %v767 = vpop.permute.xlu0 %766
        %769 = vset.pattern.permute.xlu0 1
        %770 = vperm.xlu0 %769, %v398
        %v771 = vpop.permute.xlu0 %770
        %773 = vset.pattern.permute.xlu0 1
        %774 = vperm.xlu0 %773, %v399
        %v775 = vpop.permute.xlu0 %774
        %777 = vset.pattern.permute.xlu0 1
        %778 = vperm.xlu0 %777, %v400
        %v779 = vpop.permute.xlu0 %778
        %781 = vset.pattern.permute.xlu0 1
        %782 = vperm.xlu0 %781, %v401
        %v783 = vpop.permute.xlu0 %782
        %785 = vset.pattern.permute.xlu0 1
        %786 = vperm.xlu0 %785, %v402
        %v787 = vpop.permute.xlu0 %786
        %789 = vset.pattern.permute.xlu0 1
        %790 = vperm.xlu0 %789, %v403
        %v791 = vpop.permute.xlu0 %790
        %793 = vset.pattern.permute.xlu0 1
        %794 = vperm.xlu0 %793, %v404
        %v795 = vpop.permute.xlu0 %794
        %797 = vset.pattern.permute.xlu0 1
        %798 = vperm.xlu0 %797, %v405
        %v799 = vpop.permute.xlu0 %798
        %801 = vset.pattern.permute.xlu0 1
        %802 = vperm.xlu0 %801, %v406
        %v803 = vpop.permute.xlu0 %802
        %805 = vset.pattern.permute.xlu0 1
        %806 = vperm.xlu0 %805, %v407
        %v807 = vpop.permute.xlu0 %806
        %v809 = vlaneseq
        %v810 = vshrl.u32 %v809, 7
        %v811 = vsub.s32 1, %v810
        %v812 = vrot.slane %v307, %v811
        %v813 = vmul.f32 %v683, %v812
        %v814 = vmul.f32 %v687, %v812
        %v815 = vmul.f32 %v691, %v812
        %v816 = vmul.f32 %v695, %v812
        %v817 = vmul.f32 %v699, %v812
        %v818 = vmul.f32 %v703, %v812
        %v819 = vmul.f32 %v707, %v812
        %v820 = vmul.f32 %v711, %v812
        %v821 = vmul.f32 %v715, %v812
        %v822 = vmul.f32 %v719, %v812
        %v823 = vmul.f32 %v723, %v812
        %v824 = vmul.f32 %v727, %v812
        %v825 = vmul.f32 %v731, %v812
        %v826 = vmul.f32 %v735, %v812
        %v827 = vmul.f32 %v739, %v812
        %v828 = vmul.f32 %v743, %v812
        %v829 = vmul.f32 %v747, %v812
        %v830 = vmul.f32 %v751, %v812
        %v831 = vmul.f32 %v755, %v812
        %v832 = vmul.f32 %v759, %v812
        %v833 = vmul.f32 %v763, %v812
        %v834 = vmul.f32 %v767, %v812
        %v835 = vmul.f32 %v771, %v812
        %v836 = vmul.f32 %v775, %v812
        %v837 = vmul.f32 %v779, %v812
        %v838 = vmul.f32 %v783, %v812
        %v839 = vmul.f32 %v787, %v812
        %v840 = vmul.f32 %v791, %v812
        %v841 = vmul.f32 %v795, %v812
        %v842 = vmul.f32 %v799, %v812
        %v843 = vmul.f32 %v803, %v812
        %v844 = vmul.f32 %v807, %v812
        %v845 = vadd.f32 %v572, %v813
        %v846 = vadd.f32 %v573, %v814
        %v847 = vadd.f32 %v574, %v815
        %v848 = vadd.f32 %v575, %v816
        %v849 = vadd.f32 %v576, %v817
        %v850 = vadd.f32 %v577, %v818
        %v851 = vadd.f32 %v578, %v819
        %v852 = vadd.f32 %v579, %v820
        %v853 = vadd.f32 %v580, %v821
        %v854 = vadd.f32 %v581, %v822
        %v855 = vadd.f32 %v582, %v823
        %v856 = vadd.f32 %v583, %v824
        %v857 = vadd.f32 %v584, %v825
        %v858 = vadd.f32 %v585, %v826
        %v859 = vadd.f32 %v586, %v827
        %v860 = vadd.f32 %v587, %v828
        %v861 = vadd.f32 %v588, %v829
        %v862 = vadd.f32 %v589, %v830
        %v863 = vadd.f32 %v590, %v831
        %v864 = vadd.f32 %v591, %v832
        %v865 = vadd.f32 %v592, %v833
        %v866 = vadd.f32 %v593, %v834
        %v867 = vadd.f32 %v594, %v835
        %v868 = vadd.f32 %v595, %v836
        %v869 = vadd.f32 %v596, %v837
        %v870 = vadd.f32 %v597, %v838
        %v871 = vadd.f32 %v598, %v839
        %v872 = vadd.f32 %v599, %v840
        %v873 = vadd.f32 %v600, %v841
        %v874 = vadd.f32 %v601, %v842
        %v875 = vadd.f32 %v602, %v843
        %v876 = vadd.f32 %v603, %v844
        %s877 = scalar_lea.vmem %s2, 2
        %v878 = vld [vmem:[%s877] ss:$4 sm:$0x3]
        %879 = vset.pattern.permute.xlu0 2
        %880 = vperm.xlu0 %879, %v299
        %v881 = vpop.permute.xlu0 %880
        %883 = vset.pattern.permute.xlu0 2
        %884 = vperm.xlu0 %883, %v300
        %v885 = vpop.permute.xlu0 %884
        %887 = vset.pattern.permute.xlu0 2
        %888 = vperm.xlu0 %887, %v301
        %v889 = vpop.permute.xlu0 %888
        %891 = vset.pattern.permute.xlu0 2
        %892 = vperm.xlu0 %891, %v302
        %v893 = vpop.permute.xlu0 %892
        %895 = vset.pattern.permute.xlu0 2
        %896 = vperm.xlu0 %895, %v303
        %v897 = vpop.permute.xlu0 %896
        %899 = vset.pattern.permute.xlu0 2
        %900 = vperm.xlu0 %899, %v304
        %v901 = vpop.permute.xlu0 %900
        %903 = vset.pattern.permute.xlu0 2
        %904 = vperm.xlu0 %903, %v305
        %v905 = vpop.permute.xlu0 %904
        %907 = vset.pattern.permute.xlu0 2
        %908 = vperm.xlu0 %907, %v306
        %v909 = vpop.permute.xlu0 %908
        %v912 = vlaneseq
        %v913 = vshrl.u32 %v912, 7
        %v914 = vsub.s32 0, %v913
        %v915 = vrot.slane %v878, %v914
        %v916 = vlaneseq
        %v917 = vshrl.u32 %v916, 7
        %v918 = vsub.s32 1, %v917
        %v919 = vrot.slane %v878, %v918
        %v922 = vmul.f32 %v881, %v915
        %v923 = vmul.f32 %v881, %v919
        %v924 = vmul.f32 %v885, %v915
        %v925 = vmul.f32 %v885, %v919
        %v926 = vmul.f32 %v889, %v915
        %v927 = vmul.f32 %v889, %v919
        %v928 = vmul.f32 %v893, %v915
        %v929 = vmul.f32 %v893, %v919
        %v930 = vmul.f32 %v897, %v915
        %v931 = vmul.f32 %v897, %v919
        %v932 = vmul.f32 %v901, %v915
        %v933 = vmul.f32 %v901, %v919
        %v934 = vmul.f32 %v905, %v915
        %v935 = vmul.f32 %v905, %v919
        %v936 = vmul.f32 %v909, %v915
        %v937 = vmul.f32 %v909, %v919
        %v938 = vadd.f32 %v665, %v922
        %v939 = vadd.f32 %v666, %v923
        %v940 = vadd.f32 %v667, %v924
        %v941 = vadd.f32 %v668, %v925
        %v942 = vadd.f32 %v669, %v926
        %v943 = vadd.f32 %v670, %v927
        %v944 = vadd.f32 %v671, %v928
        %v945 = vadd.f32 %v672, %v929
        %v946 = vadd.f32 %v673, %v930
        %v947 = vadd.f32 %v674, %v931
        %v948 = vadd.f32 %v675, %v932
        %v949 = vadd.f32 %v676, %v933
        %v950 = vadd.f32 %v677, %v934
        %v951 = vadd.f32 %v678, %v935
        %v952 = vadd.f32 %v679, %v936
        %v953 = vadd.f32 %v680, %v937
        %954 = vset.pattern.permute.xlu0 2
        %955 = vperm.xlu0 %954, %v376
        %v956 = vpop.permute.xlu0 %955
        %958 = vset.pattern.permute.xlu0 2
        %959 = vperm.xlu0 %958, %v377
        %v960 = vpop.permute.xlu0 %959
        %962 = vset.pattern.permute.xlu0 2
        %963 = vperm.xlu0 %962, %v378
        %v964 = vpop.permute.xlu0 %963
        %966 = vset.pattern.permute.xlu0 2
        %967 = vperm.xlu0 %966, %v379
        %v968 = vpop.permute.xlu0 %967
        %970 = vset.pattern.permute.xlu0 2
        %971 = vperm.xlu0 %970, %v380
        %v972 = vpop.permute.xlu0 %971
        %974 = vset.pattern.permute.xlu0 2
        %975 = vperm.xlu0 %974, %v381
        %v976 = vpop.permute.xlu0 %975
        %978 = vset.pattern.permute.xlu0 2
        %979 = vperm.xlu0 %978, %v382
        %v980 = vpop.permute.xlu0 %979
        %982 = vset.pattern.permute.xlu0 2
        %983 = vperm.xlu0 %982, %v383
        %v984 = vpop.permute.xlu0 %983
        %986 = vset.pattern.permute.xlu0 2
        %987 = vperm.xlu0 %986, %v384
        %v988 = vpop.permute.xlu0 %987
        %990 = vset.pattern.permute.xlu0 2
        %991 = vperm.xlu0 %990, %v385
        %v992 = vpop.permute.xlu0 %991
        %994 = vset.pattern.permute.xlu0 2
        %995 = vperm.xlu0 %994, %v386
        %v996 = vpop.permute.xlu0 %995
        %998 = vset.pattern.permute.xlu0 2
        %999 = vperm.xlu0 %998, %v387
        %v1000 = vpop.permute.xlu0 %999
        %1002 = vset.pattern.permute.xlu0 2
        %1003 = vperm.xlu0 %1002, %v388
        %v1004 = vpop.permute.xlu0 %1003
        %1006 = vset.pattern.permute.xlu0 2
        %1007 = vperm.xlu0 %1006, %v389
        %v1008 = vpop.permute.xlu0 %1007
        %1010 = vset.pattern.permute.xlu0 2
        %1011 = vperm.xlu0 %1010, %v390
        %v1012 = vpop.permute.xlu0 %1011
        %1014 = vset.pattern.permute.xlu0 2
        %1015 = vperm.xlu0 %1014, %v391
        %v1016 = vpop.permute.xlu0 %1015
        %1018 = vset.pattern.permute.xlu0 2
        %1019 = vperm.xlu0 %1018, %v392
        %v1020 = vpop.permute.xlu0 %1019
        %1022 = vset.pattern.permute.xlu0 2
        %1023 = vperm.xlu0 %1022, %v393
        %v1024 = vpop.permute.xlu0 %1023
        %1026 = vset.pattern.permute.xlu0 2
        %1027 = vperm.xlu0 %1026, %v394
        %v1028 = vpop.permute.xlu0 %1027
        %1030 = vset.pattern.permute.xlu0 2
        %1031 = vperm.xlu0 %1030, %v395
        %v1032 = vpop.permute.xlu0 %1031
        %1034 = vset.pattern.permute.xlu0 2
        %1035 = vperm.xlu0 %1034, %v396
        %v1036 = vpop.permute.xlu0 %1035
        %1038 = vset.pattern.permute.xlu0 2
        %1039 = vperm.xlu0 %1038, %v397
        %v1040 = vpop.permute.xlu0 %1039
        %1042 = vset.pattern.permute.xlu0 2
        %1043 = vperm.xlu0 %1042, %v398
        %v1044 = vpop.permute.xlu0 %1043
        %1046 = vset.pattern.permute.xlu0 2
        %1047 = vperm.xlu0 %1046, %v399
        %v1048 = vpop.permute.xlu0 %1047
        %1050 = vset.pattern.permute.xlu0 2
        %1051 = vperm.xlu0 %1050, %v400
        %v1052 = vpop.permute.xlu0 %1051
        %1054 = vset.pattern.permute.xlu0 2
        %1055 = vperm.xlu0 %1054, %v401
        %v1056 = vpop.permute.xlu0 %1055
        %1058 = vset.pattern.permute.xlu0 2
        %1059 = vperm.xlu0 %1058, %v402
        %v1060 = vpop.permute.xlu0 %1059
        %1062 = vset.pattern.permute.xlu0 2
        %1063 = vperm.xlu0 %1062, %v403
        %v1064 = vpop.permute.xlu0 %1063
        %1066 = vset.pattern.permute.xlu0 2
        %1067 = vperm.xlu0 %1066, %v404
        %v1068 = vpop.permute.xlu0 %1067
        %1070 = vset.pattern.permute.xlu0 2
        %1071 = vperm.xlu0 %1070, %v405
        %v1072 = vpop.permute.xlu0 %1071
        %1074 = vset.pattern.permute.xlu0 2
        %1075 = vperm.xlu0 %1074, %v406
        %v1076 = vpop.permute.xlu0 %1075
        %1078 = vset.pattern.permute.xlu0 2
        %1079 = vperm.xlu0 %1078, %v407
        %v1080 = vpop.permute.xlu0 %1079
        %v1082 = vlaneseq
        %v1083 = vshrl.u32 %v1082, 7
        %v1084 = vsub.s32 2, %v1083
        %v1085 = vrot.slane %v307, %v1084
        %v1086 = vmul.f32 %v956, %v1085
        %v1087 = vmul.f32 %v960, %v1085
        %v1088 = vmul.f32 %v964, %v1085
        %v1089 = vmul.f32 %v968, %v1085
        %v1090 = vmul.f32 %v972, %v1085
        %v1091 = vmul.f32 %v976, %v1085
        %v1092 = vmul.f32 %v980, %v1085
        %v1093 = vmul.f32 %v984, %v1085
        %v1094 = vmul.f32 %v988, %v1085
        %v1095 = vmul.f32 %v992, %v1085
        %v1096 = vmul.f32 %v996, %v1085
        %v1097 = vmul.f32 %v1000, %v1085
        %v1098 = vmul.f32 %v1004, %v1085
        %v1099 = vmul.f32 %v1008, %v1085
        %v1100 = vmul.f32 %v1012, %v1085
        %v1101 = vmul.f32 %v1016, %v1085
        %v1102 = vmul.f32 %v1020, %v1085
        %v1103 = vmul.f32 %v1024, %v1085
        %v1104 = vmul.f32 %v1028, %v1085
        %v1105 = vmul.f32 %v1032, %v1085
        %v1106 = vmul.f32 %v1036, %v1085
        %v1107 = vmul.f32 %v1040, %v1085
        %v1108 = vmul.f32 %v1044, %v1085
        %v1109 = vmul.f32 %v1048, %v1085
        %v1110 = vmul.f32 %v1052, %v1085
        %v1111 = vmul.f32 %v1056, %v1085
        %v1112 = vmul.f32 %v1060, %v1085
        %v1113 = vmul.f32 %v1064, %v1085
        %v1114 = vmul.f32 %v1068, %v1085
        %v1115 = vmul.f32 %v1072, %v1085
        %v1116 = vmul.f32 %v1076, %v1085
        %v1117 = vmul.f32 %v1080, %v1085
        %v1118 = vadd.f32 %v845, %v1086
        %v1119 = vadd.f32 %v846, %v1087
        %v1120 = vadd.f32 %v847, %v1088
        %v1121 = vadd.f32 %v848, %v1089
        %v1122 = vadd.f32 %v849, %v1090
        %v1123 = vadd.f32 %v850, %v1091
        %v1124 = vadd.f32 %v851, %v1092
        %v1125 = vadd.f32 %v852, %v1093
        %v1126 = vadd.f32 %v853, %v1094
        %v1127 = vadd.f32 %v854, %v1095
        %v1128 = vadd.f32 %v855, %v1096
        %v1129 = vadd.f32 %v856, %v1097
        %v1130 = vadd.f32 %v857, %v1098
        %v1131 = vadd.f32 %v858, %v1099
        %v1132 = vadd.f32 %v859, %v1100
        %v1133 = vadd.f32 %v860, %v1101
        %v1134 = vadd.f32 %v861, %v1102
        %v1135 = vadd.f32 %v862, %v1103
        %v1136 = vadd.f32 %v863, %v1104
        %v1137 = vadd.f32 %v864, %v1105
        %v1138 = vadd.f32 %v865, %v1106
        %v1139 = vadd.f32 %v866, %v1107
        %v1140 = vadd.f32 %v867, %v1108
        %v1141 = vadd.f32 %v868, %v1109
        %v1142 = vadd.f32 %v869, %v1110
        %v1143 = vadd.f32 %v870, %v1111
        %v1144 = vadd.f32 %v871, %v1112
        %v1145 = vadd.f32 %v872, %v1113
        %v1146 = vadd.f32 %v873, %v1114
        %v1147 = vadd.f32 %v874, %v1115
        %v1148 = vadd.f32 %v875, %v1116
        %v1149 = vadd.f32 %v876, %v1117
        %v1150 = vld [vmem:[%s3] sm:$0x3]
        %v1152 = vlaneseq
        %v1153 = vshrl.u32 %v1152, 7
        %v1154 = vsub.s32 0, %v1153
        %v1155 = vrot.slane %v1150, %v1154
        %v1156 = vlaneseq
        %v1157 = vshrl.u32 %v1156, 7
        %v1158 = vsub.s32 1, %v1157
        %v1159 = vrot.slane %v1150, %v1158
        %v1162 = vadd.f32 %v938, %v1155
        %v1163 = vadd.f32 %v939, %v1159
        %v1164 = vadd.f32 %v940, %v1155
        %v1165 = vadd.f32 %v941, %v1159
        %v1166 = vadd.f32 %v942, %v1155
        %v1167 = vadd.f32 %v943, %v1159
        %v1168 = vadd.f32 %v944, %v1155
        %v1169 = vadd.f32 %v945, %v1159
        %v1170 = vadd.f32 %v946, %v1155
        %v1171 = vadd.f32 %v947, %v1159
        %v1172 = vadd.f32 %v948, %v1155
        %v1173 = vadd.f32 %v949, %v1159
        %v1174 = vadd.f32 %v950, %v1155
        %v1175 = vadd.f32 %v951, %v1159
        %v1176 = vadd.f32 %v952, %v1155
        %v1177 = vadd.f32 %v953, %v1159
        %v1178 = vld [vmem:[%s5] sm:$0xff]
        %v1179 = vld [vmem:[%s5 + $0x8] sm:$0xff]
        %v1180 = vld [vmem:[%s5 + $0x10] sm:$0xff]
        %v1181 = vld [vmem:[%s5 + $0x18] sm:$0xff]
        %v1182 = vld [vmem:[%s5 + $0x20] sm:$0xff]
        %v1183 = vld [vmem:[%s5 + $0x28] sm:$0xff]
        %v1184 = vld [vmem:[%s5 + $0x30] sm:$0xff]
        %v1185 = vld [vmem:[%s5 + $0x38] sm:$0xff]
        %v1186 = vld [vmem:[%s5 + $0x40] sm:$0xff]
        %v1187 = vld [vmem:[%s5 + $0x48] sm:$0xff]
        %v1188 = vld [vmem:[%s5 + $0x50] sm:$0xff]
        %v1189 = vld [vmem:[%s5 + $0x58] sm:$0xff]
        %v1190 = vld [vmem:[%s5 + $0x60] sm:$0xff]
        %v1191 = vld [vmem:[%s5 + $0x68] sm:$0xff]
        %v1192 = vld [vmem:[%s5 + $0x70] sm:$0xff]
        %v1193 = vld [vmem:[%s5 + $0x78] sm:$0xff]
        %v1194 = vld [vmem:[%s5 + $0x80] sm:$0xff]
        %v1195 = vld [vmem:[%s5 + $0x88] sm:$0xff]
        %v1196 = vld [vmem:[%s5 + $0x90] sm:$0xff]
        %v1197 = vld [vmem:[%s5 + $0x98] sm:$0xff]
        %v1198 = vld [vmem:[%s5 + $0xa0] sm:$0xff]
        %v1199 = vld [vmem:[%s5 + $0xa8] sm:$0xff]
        %v1200 = vld [vmem:[%s5 + $0xb0] sm:$0xff]
        %v1201 = vld [vmem:[%s5 + $0xb8] sm:$0xff]
        %v1202 = vld [vmem:[%s5 + $0xc0] sm:$0xff]
        %v1203 = vld [vmem:[%s5 + $0xc8] sm:$0xff]
        %v1204 = vld [vmem:[%s5 + $0xd0] sm:$0xff]
        %v1205 = vld [vmem:[%s5 + $0xd8] sm:$0xff]
        %v1206 = vld [vmem:[%s5 + $0xe0] sm:$0xff]
        %v1207 = vld [vmem:[%s5 + $0xe8] sm:$0xff]
        %v1208 = vld [vmem:[%s5 + $0xf0] sm:$0xff]
        %v1209 = vld [vmem:[%s5 + $0xf8] sm:$0xff]
        %1211 = vset.pattern.permute.xlu0 0
        %1212 = vperm.xlu0 %1211, %v1178
        %v1213 = vpop.permute.xlu0 %1212
        %1216 = vset.pattern.permute.xlu0 0
        %1217 = vperm.xlu0 %1216, %v1179
        %v1218 = vpop.permute.xlu0 %1217
        %1221 = vset.pattern.permute.xlu0 0
        %1222 = vperm.xlu0 %1221, %v1180
        %v1223 = vpop.permute.xlu0 %1222
        %1226 = vset.pattern.permute.xlu0 0
        %1227 = vperm.xlu0 %1226, %v1181
        %v1228 = vpop.permute.xlu0 %1227
        %1231 = vset.pattern.permute.xlu0 0
        %1232 = vperm.xlu0 %1231, %v1182
        %v1233 = vpop.permute.xlu0 %1232
        %1236 = vset.pattern.permute.xlu0 0
        %1237 = vperm.xlu0 %1236, %v1183
        %v1238 = vpop.permute.xlu0 %1237
        %1241 = vset.pattern.permute.xlu0 0
        %1242 = vperm.xlu0 %1241, %v1184
        %v1243 = vpop.permute.xlu0 %1242
        %1246 = vset.pattern.permute.xlu0 0
        %1247 = vperm.xlu0 %1246, %v1185
        %v1248 = vpop.permute.xlu0 %1247
        %1251 = vset.pattern.permute.xlu0 0
        %1252 = vperm.xlu0 %1251, %v1186
        %v1253 = vpop.permute.xlu0 %1252
        %1256 = vset.pattern.permute.xlu0 0
        %1257 = vperm.xlu0 %1256, %v1187
        %v1258 = vpop.permute.xlu0 %1257
        %1261 = vset.pattern.permute.xlu0 0
        %1262 = vperm.xlu0 %1261, %v1188
        %v1263 = vpop.permute.xlu0 %1262
        %1266 = vset.pattern.permute.xlu0 0
        %1267 = vperm.xlu0 %1266, %v1189
        %v1268 = vpop.permute.xlu0 %1267
        %1271 = vset.pattern.permute.xlu0 0
        %1272 = vperm.xlu0 %1271, %v1190
        %v1273 = vpop.permute.xlu0 %1272
        %1276 = vset.pattern.permute.xlu0 0
        %1277 = vperm.xlu0 %1276, %v1191
        %v1278 = vpop.permute.xlu0 %1277
        %1281 = vset.pattern.permute.xlu0 0
        %1282 = vperm.xlu0 %1281, %v1192
        %v1283 = vpop.permute.xlu0 %1282
        %1286 = vset.pattern.permute.xlu0 0
        %1287 = vperm.xlu0 %1286, %v1193
        %v1288 = vpop.permute.xlu0 %1287
        %1291 = vset.pattern.permute.xlu0 0
        %1292 = vperm.xlu0 %1291, %v1194
        %v1293 = vpop.permute.xlu0 %1292
        %1296 = vset.pattern.permute.xlu0 0
        %1297 = vperm.xlu0 %1296, %v1195
        %v1298 = vpop.permute.xlu0 %1297
        %1301 = vset.pattern.permute.xlu0 0
        %1302 = vperm.xlu0 %1301, %v1196
        %v1303 = vpop.permute.xlu0 %1302
        %1306 = vset.pattern.permute.xlu0 0
        %1307 = vperm.xlu0 %1306, %v1197
        %v1308 = vpop.permute.xlu0 %1307
        %1311 = vset.pattern.permute.xlu0 0
        %1312 = vperm.xlu0 %1311, %v1198
        %v1313 = vpop.permute.xlu0 %1312
        %1316 = vset.pattern.permute.xlu0 0
        %1317 = vperm.xlu0 %1316, %v1199
        %v1318 = vpop.permute.xlu0 %1317
        %1321 = vset.pattern.permute.xlu0 0
        %1322 = vperm.xlu0 %1321, %v1200
        %v1323 = vpop.permute.xlu0 %1322
        %1326 = vset.pattern.permute.xlu0 0
        %1327 = vperm.xlu0 %1326, %v1201
        %v1328 = vpop.permute.xlu0 %1327
        %1331 = vset.pattern.permute.xlu0 0
        %1332 = vperm.xlu0 %1331, %v1202
        %v1333 = vpop.permute.xlu0 %1332
        %1336 = vset.pattern.permute.xlu0 0
        %1337 = vperm.xlu0 %1336, %v1203
        %v1338 = vpop.permute.xlu0 %1337
        %1341 = vset.pattern.permute.xlu0 0
        %1342 = vperm.xlu0 %1341, %v1204
        %v1343 = vpop.permute.xlu0 %1342
        %1346 = vset.pattern.permute.xlu0 0
        %1347 = vperm.xlu0 %1346, %v1205
        %v1348 = vpop.permute.xlu0 %1347
        %1351 = vset.pattern.permute.xlu0 0
        %1352 = vperm.xlu0 %1351, %v1206
        %v1353 = vpop.permute.xlu0 %1352
        %1356 = vset.pattern.permute.xlu0 0
        %1357 = vperm.xlu0 %1356, %v1207
        %v1358 = vpop.permute.xlu0 %1357
        %1361 = vset.pattern.permute.xlu0 0
        %1362 = vperm.xlu0 %1361, %v1208
        %v1363 = vpop.permute.xlu0 %1362
        %1366 = vset.pattern.permute.xlu0 0
        %1367 = vperm.xlu0 %1366, %v1209
        %v1368 = vpop.permute.xlu0 %1367
        %v1370 = vadd.f32 %v1118, %v1213
        %v1371 = vadd.f32 %v1119, %v1218
        %v1372 = vadd.f32 %v1120, %v1223
        %v1373 = vadd.f32 %v1121, %v1228
        %v1374 = vadd.f32 %v1122, %v1233
        %v1375 = vadd.f32 %v1123, %v1238
        %v1376 = vadd.f32 %v1124, %v1243
        %v1377 = vadd.f32 %v1125, %v1248
        %v1378 = vadd.f32 %v1126, %v1253
        %v1379 = vadd.f32 %v1127, %v1258
        %v1380 = vadd.f32 %v1128, %v1263
        %v1381 = vadd.f32 %v1129, %v1268
        %v1382 = vadd.f32 %v1130, %v1273
        %v1383 = vadd.f32 %v1131, %v1278
        %v1384 = vadd.f32 %v1132, %v1283
        %v1385 = vadd.f32 %v1133, %v1288
        %v1386 = vadd.f32 %v1134, %v1293
        %v1387 = vadd.f32 %v1135, %v1298
        %v1388 = vadd.f32 %v1136, %v1303
        %v1389 = vadd.f32 %v1137, %v1308
        %v1390 = vadd.f32 %v1138, %v1313
        %v1391 = vadd.f32 %v1139, %v1318
        %v1392 = vadd.f32 %v1140, %v1323
        %v1393 = vadd.f32 %v1141, %v1328
        %v1394 = vadd.f32 %v1142, %v1333
        %v1395 = vadd.f32 %v1143, %v1338
        %v1396 = vadd.f32 %v1144, %v1343
        %v1397 = vadd.f32 %v1145, %v1348
        %v1398 = vadd.f32 %v1146, %v1353
        %v1399 = vadd.f32 %v1147, %v1358
        %v1400 = vadd.f32 %v1148, %v1363
        %v1401 = vadd.f32 %v1149, %v1368
        %v1402 = vpack.c.bf16 %v1164, %v1162
        %v1403 = vpack.c.bf16 %v1165, %v1163
        %v1404 = vpack.c.bf16 %v1168, %v1166
        %v1405 = vpack.c.bf16 %v1169, %v1167
        %v1406 = vpack.c.bf16 %v1172, %v1170
        %v1407 = vpack.c.bf16 %v1173, %v1171
        %v1408 = vpack.c.bf16 %v1176, %v1174
        %v1409 = vpack.c.bf16 %v1177, %v1175
        %v1410 = vpack.c.bf16 %v1371, %v1370
        %v1411 = vpack.c.bf16 %v1373, %v1372
        %v1412 = vpack.c.bf16 %v1375, %v1374
        %v1413 = vpack.c.bf16 %v1377, %v1376
        %v1414 = vpack.c.bf16 %v1379, %v1378
        %v1415 = vpack.c.bf16 %v1381, %v1380
        %v1416 = vpack.c.bf16 %v1383, %v1382
        %v1417 = vpack.c.bf16 %v1385, %v1384
        %v1418 = vpack.c.bf16 %v1387, %v1386
        %v1419 = vpack.c.bf16 %v1389, %v1388
        %v1420 = vpack.c.bf16 %v1391, %v1390
        %v1421 = vpack.c.bf16 %v1393, %v1392
        %v1422 = vpack.c.bf16 %v1395, %v1394
        %v1423 = vpack.c.bf16 %v1397, %v1396
        %v1424 = vpack.c.bf16 %v1399, %v1398
        %v1425 = vpack.c.bf16 %v1401, %v1400
        %1426 = vmatprep.subr.bf16.mxu0 0
        %1427 = vmatpush1.bf16.msra.mxu0 %v1410
        %1428 = vmatprep.subr.bf16.mxu0 0
        %1429 = vmatpush1.bf16.msra.mxu0 %v1411
        %1430 = vmatprep.subr.bf16.mxu0 0
        %1431 = vmatpush1.bf16.msra.mxu0 %v1412
        %1432 = vmatprep.subr.bf16.mxu0 0
        %1433 = vmatpush1.bf16.msra.mxu0 %v1413
        %1434 = vmatprep.subr.bf16.mxu0 0
        %1435 = vmatpush1.bf16.msra.mxu0 %v1414
        %1436 = vmatprep.subr.bf16.mxu0 0
        %1437 = vmatpush1.bf16.msra.mxu0 %v1415
        %1438 = vmatprep.subr.bf16.mxu0 0
        %1439 = vmatpush1.bf16.msra.mxu0 %v1416
        %1440 = vmatprep.subr.bf16.mxu0 0
        %1441 = vmatpush1.bf16.msra.mxu0 %v1417
        %1442 = vmatprep.subr.bf16.mxu0 0
        %1443 = vmatpush1.bf16.msra.mxu0 %v1418
        %1444 = vmatprep.subr.bf16.mxu0 0
        %1445 = vmatpush1.bf16.msra.mxu0 %v1419
        %1446 = vmatprep.subr.bf16.mxu0 0
        %1447 = vmatpush1.bf16.msra.mxu0 %v1420
        %1448 = vmatprep.subr.bf16.mxu0 0
        %1449 = vmatpush1.bf16.msra.mxu0 %v1421
        %1450 = vmatprep.subr.bf16.mxu0 0
        %1451 = vmatpush1.bf16.msra.mxu0 %v1422
        %1452 = vmatprep.subr.bf16.mxu0 0
        %1453 = vmatpush1.bf16.msra.mxu0 %v1423
        %1454 = vmatprep.subr.bf16.mxu0 0
        %1455 = vmatpush1.bf16.msra.mxu0 %v1424
        %1456 = vmatprep.subr.bf16.mxu0 0
        %1457 = vmatpush1.bf16.msra.mxu0 %v1425
        %1458 = vmatprep.mubr.bf16.mxu0 %v1403
        %1459 = vmatmul.mubr.bf16.gmra.mrb[0].mxu0 %v1402
        %v1460 = vpop.f32.mrb[0].mxu0
        %v1461 = vadd.f32 0.0, %v1460
        %v1462 = vpop.f32.mrb[0].mxu0
        %v1463 = vpop.f32.mrb[0].mxu0
        %v1464 = vadd.f32 0.0, %v1463
        %v1465 = vpop.f32.mrb[0].mxu0
        %1466 = vmatprep.mubr.bf16.mxu0 %v1405
        %1467 = vmatmul.mubr.bf16.gmra.mrb[0].mxu0 %v1404
        %v1468 = vpop.f32.mrb[0].mxu0
        %v1469 = vadd.f32 0.0, %v1468
        %v1470 = vpop.f32.mrb[0].mxu0
        %v1471 = vpop.f32.mrb[0].mxu0
        %v1472 = vadd.f32 0.0, %v1471
        %v1473 = vpop.f32.mrb[0].mxu0
        %1474 = vmatprep.mubr.bf16.mxu0 %v1407
        %1475 = vmatmul.mubr.bf16.gmra.mrb[0].mxu0 %v1406
        %v1476 = vpop.f32.mrb[0].mxu0
        %v1477 = vadd.f32 0.0, %v1476
        %v1478 = vpop.f32.mrb[0].mxu0
        %v1479 = vpop.f32.mrb[0].mxu0
        %v1480 = vadd.f32 0.0, %v1479
        %v1481 = vpop.f32.mrb[0].mxu0
        %1482 = vmatprep.mubr.bf16.mxu0 %v1409
        %1483 = vmatmul.mubr.bf16.gmra.mrb[0].mxu0 %v1408
        %v1484 = vpop.f32.mrb[0].mxu0
        %v1485 = vadd.f32 0.0, %v1484
        %v1486 = vpop.f32.mrb[0].mxu0
        %v1487 = vpop.f32.mrb[0].mxu0
        %v1488 = vadd.f32 0.0, %v1487
        %v1489 = vpop.f32.mrb[0].mxu0
        %1490 = vdwg.mxu0
        %v1491 = vmul.f32 %v1461, 0.08703883
        %v1492 = vmul.f32 %v1464, 0.08703883
        %v1493 = vmul.f32 %v1469, 0.08703883
        %v1494 = vmul.f32 %v1472, 0.08703883
        %v1495 = vmul.f32 %v1477, 0.08703883
        %v1496 = vmul.f32 %v1480, 0.08703883
        %v1497 = vmul.f32 %v1485, 0.08703883
        %v1498 = vmul.f32 %v1488, 0.08703883
        %vm1499 = vcmask 523264
        %1500 = vst.msk [vmem:[%s282] sm:$0xff] %vm1499, %v1491
        %1501 = vst.msk [vmem:[%s282 + $0x8] sm:$0xff] %vm1499, %v1492
        %1502 = vst.msk [vmem:[%s282 + $0x10] sm:$0xff] %vm1499, %v1493
        %1503 = vst.msk [vmem:[%s282 + $0x18] sm:$0xff] %vm1499, %v1494
        %1504 = vst.msk [vmem:[%s282 + $0x20] sm:$0xff] %vm1499, %v1495
        %1505 = vst.msk [vmem:[%s282 + $0x28] sm:$0xff] %vm1499, %v1496
        %1506 = vst.msk [vmem:[%s282 + $0x30] sm:$0xff] %vm1499, %v1497
        %1507 = vst.msk [vmem:[%s282 + $0x38] sm:$0xff] %vm1499, %v1498
        %s1508 = sand.u32 %s180, 1
        %s1509 = scalar_lea.sflag [#allocation3], %s1508
        %s1510 = sand.u32 %s180, 1
        %s1511 = smul.addr %s1510, 64
        %s1512 = scalar_lea.vmem [#allocation2], %s1511
        // Predicated region
        $region45: #{tpu_custom_call.1} parent=43 // pred_check
          %p1513 = pneg %p190
        $region46: #{tpu_custom_call.1} parent=43 // pred_check_branch
          %1515 = sbr.rel (%p1513) target = $region48
        $region47: #{tpu_custom_call.1} parent=43 // pred_region
          %s1516 = smul.u32 8, %s25
          %s1518 = ssub.s32 1024, 1024
          %1519 = vsyncadd %s1509, %s1518
          %s1520 = smul.addr %s24, 8
          %s1521 = sadd.s32 %s1516, %s1520
          %s1522 = smul.addr %s1521, 128
          %s1523 = scalar_lea.hbm %s6, %s1522
          %s1524 = sshll.u32 %s1512, 4
          %s1525 = int_to_ptr.vmem [resolvable:$true] %s1524
          %1530 = dma.vmem_to_hbm [thread:$0]  %s1525, 1024, %s1523, %s1509, 128, 128, 8
        $region48: #{tpu_custom_call.1} parent=43 // pred_fallthru
          _
      $region44: #{tpu_custom_call.1} parent=5 // pred_fallthru
        _
      %p1531 = scmp.le.s32.totalorder 2, %s15
      // Predicated region
      $region49: #{tpu_custom_call.1} parent=5 // pred_check
        %p1532 = pneg %p1531
      $region50: #{tpu_custom_call.1} parent=5 // pred_check_branch
        %1534 = sbr.rel (%p1532) target = $region52
      $region51: #{tpu_custom_call.1} parent=5 // pred_region
        %s1535 = ssub.s32 %s15, 2
        // Predicated region
        $region53: #{tpu_custom_call.1} parent=51 // pred_check
          %p1536 = pneg %p196
        $region54: #{tpu_custom_call.1} parent=51 // pred_check_branch
          %1538 = sbr.rel (%p1536) target = $region56
        $region55: #{tpu_custom_call.1} parent=51 // pred_region
          %s1539 = sand.u32 %s181, 1
          %s1540 = scalar_lea.sflag [#allocation3], %s1539
          %s1541 = sand.u32 %s181, 1
          %s1542 = smul.addr %s1541, 64
          %s1543 = scalar_lea.vmem [#allocation2], %s1542
          %1544 = dma.done %s1540, 1024
        $region56: #{tpu_custom_call.1} parent=51 // pred_fallthru
          _
      $region52: #{tpu_custom_call.1} parent=5 // pred_fallthru
        _
    $region6: #{tpu_custom_call.1} parent=1 // loop_footer
      %s19 = sadd.s32 1, %s15
    $region7: #{tpu_custom_call.1} parent=1 // loop_footer_branch
      %14 = sbr.rel target = $region3
    $region8: #{tpu_custom_call.1} parent=1 // loop_exit
      _
    %1545 = vsyncpa [#allocation3], 1
    %s1546 = scalar_lea.sflag [#allocation3], 1
    %1547 = vsyncpa %s1546, 1

</llo_original>
